<compile_context>
chip_gen: v7x
topology: tpu7x:2x2x1
jax: 0.10.0
libtpu: 0.0.40
codegen_flags: <defaults>
</compile_context>

<pallas_src>
import math
from functools import partial

import jax
import jax.numpy as jnp
from jax import lax
from jax.experimental import pallas as pl
from jax.experimental.pallas import tpu as pltpu


# ---------------------------------------------------------------------------
# Fused kernel: qkv projection + flash-style MHA + output projection
# One grid step = (batch b, query tile qi, kv tile ki); ki is the reduction.
# ---------------------------------------------------------------------------
def _fused_attention_kernel(xq_ref, xkv_ref, wqkv_ref, wproj_ref, bproj_ref,
                            o_ref, q_scr, acc_scr, m_scr, l_scr,
                            *, num_heads, scale):
    """
    xq_ref:    (Tq, C)  bf16  query-token activations (batch dim squeezed)
    xkv_ref:   (Tk, C)  bf16  kv-token activations for this KV tile
    wqkv_ref:  (C, 3C)  bf16  qkv weight (columns: [q|k|v], each [head][D]-major)
    wproj_ref: (C, C)   bf16  output-projection weight
    bproj_ref: (1, C)   f32   output-projection bias
    o_ref:     (Tq, C)  f32   output tile (lane-dense, written once on last ki)
    q_scr:     (Tq, C)  bf16  pre-scaled q, computed once per (b, qi)
    acc_scr:   (Tq, C)  f32   merged per-head un-normalized PV accumulator
    m_scr:     (H, Tq, 1) f32 running row-max per head
    l_scr:     (H, Tq, 1) f32 running softmax denominator per head
    """
    Tq, C = xq_ref.shape
    D = C // num_heads
    ki = pl.program_id(2)

    # ---- init: q projection (scale folded in) + online-softmax state --------
    @pl.when(ki == 0)
    def _init():
        q = jnp.dot(xq_ref[...], wqkv_ref[:, 0:C],
                    preferred_element_type=jnp.float32) * scale
        q_scr[...] = q.astype(q_scr.dtype)
        m_scr[...] = jnp.full(m_scr.shape, -jnp.inf, dtype=m_scr.dtype)
        l_scr[...] = jnp.zeros(l_scr.shape, dtype=l_scr.dtype)
        acc_scr[...] = jnp.zeros(acc_scr.shape, dtype=acc_scr.dtype)

    # ---- K/V projection for this KV tile (all heads at once, bf16 in / f32 acc)
    # TODO(synk): for very large N, hoist the K/V projection out of the query-
    # tile loop (it is recomputed once per query tile here) via a separate
    # pass or a manually prefetched VMEM cache.
    k = jnp.dot(xkv_ref[...], wqkv_ref[:, C:2 * C],
                preferred_element_type=jnp.float32).astype(jnp.bfloat16)
    v = jnp.dot(xkv_ref[...], wqkv_ref[:, 2 * C:3 * C],
                preferred_element_type=jnp.float32).astype(jnp.bfloat16)

    # ---- per-head online softmax; heads unrolled at trace time (tiny count) --
    # With D = C/num_heads the kernel is EUP/VPU-bound, not MXU-bound, so the
    # exp path (not matmul scheduling) is the binding unit; stats stay f32.
    for h in range(num_heads):
        qh = q_scr[:, h * D:(h + 1) * D]              # (Tq, D) bf16, pre-scaled
        kh = k[:, h * D:(h + 1) * D]                  # (Tk, D) bf16
        vh = v[:, h * D:(h + 1) * D]                  # (Tk, D) bf16

        # q @ k^T by contracting last dims directly (no transpose copy).
        s = lax.dot_general(qh, kh,
                            dimension_numbers=(((1,), (1,)), ((), ())),
                            preferred_element_type=jnp.float32)  # (Tq, Tk) f32

        m_prev = m_scr[h]                                           # (Tq, 1)
        m_new = jnp.maximum(m_prev, jnp.max(s, axis=-1, keepdims=True))
        alpha = jnp.exp(m_prev - m_new)                             # (Tq, 1)
        p = jnp.exp(s - m_new)                                      # (Tq, Tk) f32

        l_scr[h] = alpha * l_scr[h] + jnp.sum(p, axis=-1, keepdims=True)
        # Un-normalized PV matmul; p cast to bf16 only at the MXU input.
        acc_scr[:, h * D:(h + 1) * D] = (
            alpha * acc_scr[:, h * D:(h + 1) * D]
            + jnp.dot(p.astype(jnp.bfloat16), vh,
                      preferred_element_type=jnp.float32))
        m_scr[h] = m_new

    # ---- finalize: normalize (after PV), merged proj matmul, single store ---
    @pl.when(ki == pl.num_programs(2) - 1)
    def _finalize():
        for h in range(num_heads):
            inv = pl.reciprocal(l_scr[h], approx=True)              # EUP vrcp
            acc_scr[:, h * D:(h + 1) * D] = acc_scr[:, h * D:(h + 1) * D] * inv
        y = jnp.dot(acc_scr[...].astype(jnp.bfloat16), wproj_ref[...],
                    preferred_element_type=jnp.float32)
        y = y + bproj_ref[...]
        o_ref[...] = y.astype(o_ref.dtype)                          # lane-dense


# ---------------------------------------------------------------------------
# Wrapper
# ---------------------------------------------------------------------------
def attention_forward(x, H, W, params, *, num_heads, scale, tq=32, tk=32):
    """Pallas implementation of Attention.forward(x, H, W): single fused call."""
    B, N, C = x.shape
    assert C % num_heads == 0 and N % tq == 0 and N % tk == 0
    assert C % 128 == 0 and tq % 16 == 0 and tk % 16 == 0  # bf16 tiling rules

    # bf16 inputs halve DMA bytes / VMEM residency; accumulation stays f32.
    x_bf = x.astype(jnp.bfloat16)
    w_qkv = params["w_qkv"].astype(jnp.bfloat16)
    w_proj = params["w_proj"].astype(jnp.bfloat16)
    b_proj = params["b_proj"].astype(jnp.float32)

    kernel = partial(_fused_attention_kernel, num_heads=num_heads, scale=scale)
    grid = (B, N // tq, N // tk)   # reduction (kv) axis last

    # TODO(synk): weight BlockSpecs have constant index_maps but are still
    # double-buffered; at production C consider pipeline_mode=pl.Buffered(1)
    # or a one-shot manual copy to reclaim VMEM on v7x.
    return pl.pallas_call(
        kernel,
        out_shape=jax.ShapeDtypeStruct((B, N, C), jnp.float32),
        grid=grid,
        in_specs=[
            pl.BlockSpec((None, tq, C), lambda b, qi, ki: (b, qi, 0)),   # x (q rows)
            pl.BlockSpec((None, tk, C), lambda b, qi, ki: (b, ki, 0)),   # x (kv rows)
            pl.BlockSpec((C, 3 * C), lambda b, qi, ki: (0, 0)),          # w_qkv
            pl.BlockSpec((C, C), lambda b, qi, ki: (0, 0)),              # w_proj
            pl.BlockSpec((1, C), lambda b, qi, ki: (0, 0)),              # b_proj
        ],
        out_specs=pl.BlockSpec((None, tq, C), lambda b, qi, ki: (b, qi, 0)),
        scratch_shapes=[
            pltpu.VMEM((tq, C), jnp.bfloat16),             # pre-scaled q
            pltpu.VMEM((tq, C), jnp.float32),              # merged head accumulator
            pltpu.VMEM((num_heads, tq, 1), jnp.float32),   # running max m
            pltpu.VMEM((num_heads, tq, 1), jnp.float32),   # running denom l
        ],
        compiler_params=pltpu.CompilerParams(
            # batch & query tiles independent (megacore), kv tiles sequential
            dimension_semantics=("parallel", "parallel", "arbitrary"),
            vmem_limit_bytes=48 * 1024 * 1024),  # safe under v7x 64 MiB physical
    )(x_bf, x_bf, w_qkv, w_proj, b_proj)


# ---------------------------------------------------------------------------
# Reference (plain JAX, f32 math from bf16-rounded inputs) for sanity checking
# ---------------------------------------------------------------------------
def attention_reference(x, params, *, num_heads, scale):
    B, N, C = x.shape
    D = C // num_heads
    xf = x.astype(jnp.bfloat16).astype(jnp.float32)
    wqkv = params["w_qkv"].astype(jnp.bfloat16).astype(jnp.float32)
    wproj = params["w_proj"].astype(jnp.bfloat16).astype(jnp.float32)
    bproj = params["b_proj"]
    qkv = xf.reshape(B * N, C) @ wqkv                       # qkv_bias=False
    qkv = qkv.reshape(B, N, 3, num_heads, D).transpose(2, 0, 3, 1, 4)
    q, k, v = qkv[0], qkv[1], qkv[2]
    attn = jnp.einsum("bhnd,bhmd->bhnm", q, k) * scale
    attn = jax.nn.softmax(attn, axis=-1)
    o = jnp.einsum("bhnm,bhmd->bhnd", attn, v)
    o = o.transpose(0, 2, 1, 3).reshape(B, N, C)
    o = o.reshape(B * N, C) @ wproj + bproj
    return o.reshape(B, N, C)


# ---------------------------------------------------------------------------
# Main
# ---------------------------------------------------------------------------
if __name__ == "__main__":
    # Small, module-consistent shapes (lane-dense channel axis: C multiple of 128).
    B, C = 2, 128                 # batch, embedding dim
    H, W = 8, 8                   # spatial hints -> N = H*W tokens
    N = H * W
    ca_num_heads = 4
    num_heads = ca_num_heads      # ca_attention=1 path
    scale = (C // num_heads) ** (-0.5)

    key = jax.random.PRNGKey(0)
    kx, kq, kp, kb = jax.random.split(key, 4)

    x = jax.random.normal(kx, (B, N, C), dtype=jnp.float32)

    # Deterministic parameter init (nn.Linear-style uniform bounds).
    bound = 1.0 / math.sqrt(C)
    params = {
        # qkv: bias=False in the module -> no bias tensor at all
        "w_qkv": jax.random.uniform(kq, (C, 3 * C), jnp.float32, -bound, bound),
        # proj: bias=True
        "w_proj": jax.random.uniform(kp, (C, C), jnp.float32, -bound, bound),
        "b_proj": jax.random.uniform(kb, (1, C), jnp.float32, -bound, bound),
    }

    out = attention_forward(x, H, W, params, num_heads=num_heads, scale=scale,
                            tq=32, tk=32)
    out = jax.block_until_ready(out)

    ref = attention_reference(x, params, num_heads=num_heads, scale=scale)
    assert out.shape == (B, N, C)
    # bf16 MXU inputs + approx reciprocal => a bit looser tolerance than pure f32.
    assert jnp.allclose(out, ref, atol=3e-2, rtol=3e-2), "mismatch vs reference"

    print("KERNEL_OK")
</pallas_src>

<mosaic_0001>
module attributes {stable_mosaic.version = 11 : i64} {
  func.func @_fused_attention_kernel(%arg0: i32, %arg1: i32, %arg2: i32, %arg3: memref<1x32x128xbf16, #tpu.memory_space<vmem>>, %arg4: memref<1x32x128xbf16, #tpu.memory_space<vmem>>, %arg5: memref<128x384xbf16, #tpu.memory_space<vmem>>, %arg6: memref<128x128xbf16, #tpu.memory_space<vmem>>, %arg7: memref<1x128xf32, #tpu.memory_space<vmem>>, %arg8: memref<1x32x128xf32, #tpu.memory_space<vmem>>, %arg9: memref<32x128xbf16, #tpu.memory_space<vmem>>, %arg10: memref<32x128xf32, #tpu.memory_space<vmem>>, %arg11: memref<4x32x1xf32, #tpu.memory_space<vmem>>, %arg12: memref<4x32x1xf32, #tpu.memory_space<vmem>>) attributes {dimension_semantics = [#tpu.dimension_semantics<parallel>, #tpu.dimension_semantics<parallel>, #tpu.dimension_semantics<arbitrary>], iteration_bounds = array<i64: 2, 2, 2>, scalar_prefetch = 0 : i64, scratch_operands = 4 : i64, tpu.core_type = #tpu.core_type<tc>, window_params = [{transform_indices = @transform_0, window_bounds = array<i64: 1, 32, 128>}, {transform_indices = @transform_1, window_bounds = array<i64: 1, 32, 128>}, {pipeline_mode = #tpu.pipeline_mode<synchronous>, transform_indices = @transform_2, window_bounds = array<i64: 128, 384>}, {pipeline_mode = #tpu.pipeline_mode<synchronous>, transform_indices = @transform_3, window_bounds = array<i64: 128, 128>}, {pipeline_mode = #tpu.pipeline_mode<synchronous>, transform_indices = @transform_4, window_bounds = array<i64: 1, 128>}, {transform_indices = @transform_5, window_bounds = array<i64: 1, 32, 128>}]} {
    %c0_i32 = arith.constant 0 : i32
    %0 = arith.cmpi eq, %arg2, %c0_i32 : i32
    %1 = arith.extui %0 : i1 to i32
    %c0_i32_0 = arith.constant 0 : i32
    %2 = arith.cmpi ne, %1, %c0_i32_0 : i32
    scf.if %2 {
      %c0_92 = arith.constant 0 : index
      %c0_93 = arith.constant 0 : index
      %c0_94 = arith.constant 0 : index
      %148 = vector.load %arg3[%c0_92, %c0_93, %c0_94] : memref<1x32x128xbf16, #tpu.memory_space<vmem>>, vector<1x32x128xbf16>
      %149 = vector.shape_cast %148 : vector<1x32x128xbf16> to vector<32x128xbf16>
      %c0_95 = arith.constant 0 : index
      %c0_96 = arith.constant 0 : index
      %150 = vector.load %arg5[%c0_95, %c0_96] : memref<128x384xbf16, #tpu.memory_space<vmem>>, vector<128x128xbf16>
      %cst_97 = arith.constant dense<0.000000e+00> : vector<32x128xf32>
      %151 = tpu.matmul %149, %150, %cst_97 {dimension_numbers = #tpu.dot_dimension_numbers<[1], [0], [0], [1], [0, 0, 1, 1], [], []>} : vector<32x128xbf16>, vector<128x128xbf16>, vector<32x128xf32> -> vector<32x128xf32>
      %cst_98 = arith.constant 0.176776692 : f32
      %152 = vector.broadcast %cst_98 : f32 to vector<32x128xf32>
      %153 = arith.mulf %151, %152 : vector<32x128xf32>
      %154 = arith.truncf %153 : vector<32x128xf32> to vector<32x128xbf16>
      %c0_99 = arith.constant 0 : index
      %c0_100 = arith.constant 0 : index
      %155 = vector.load %arg9[%c0_99, %c0_100] : memref<32x128xbf16, #tpu.memory_space<vmem>>, vector<32x128xbf16>
      tpu.vector_store %arg9[%c0_99, %c0_100], %154 {strides = array<i32>} : memref<32x128xbf16, #tpu.memory_space<vmem>>, vector<32x128xbf16>,
      %cst_101 = arith.constant 0xFF800000 : f32
      %156 = vector.broadcast %cst_101 : f32 to vector<4x32x1xf32>
      %c0_102 = arith.constant 0 : index
      %c0_103 = arith.constant 0 : index
      %c0_104 = arith.constant 0 : index
      %157 = vector.load %arg11[%c0_102, %c0_103, %c0_104] : memref<4x32x1xf32, #tpu.memory_space<vmem>>, vector<4x32x1xf32>
      tpu.vector_store %arg11[%c0_102, %c0_103, %c0_104], %156 {strides = array<i32>} : memref<4x32x1xf32, #tpu.memory_space<vmem>>, vector<4x32x1xf32>,
      %cst_105 = arith.constant 0.000000e+00 : f32
      %158 = vector.broadcast %cst_105 : f32 to vector<4x32x1xf32>
      %c0_106 = arith.constant 0 : index
      %c0_107 = arith.constant 0 : index
      %c0_108 = arith.constant 0 : index
      %159 = vector.load %arg12[%c0_106, %c0_107, %c0_108] : memref<4x32x1xf32, #tpu.memory_space<vmem>>, vector<4x32x1xf32>
      tpu.vector_store %arg12[%c0_106, %c0_107, %c0_108], %158 {strides = array<i32>} : memref<4x32x1xf32, #tpu.memory_space<vmem>>, vector<4x32x1xf32>,
      %cst_109 = arith.constant 0.000000e+00 : f32
      %160 = vector.broadcast %cst_109 : f32 to vector<32x128xf32>
      %c0_110 = arith.constant 0 : index
      %c0_111 = arith.constant 0 : index
      %161 = vector.load %arg10[%c0_110, %c0_111] : memref<32x128xf32, #tpu.memory_space<vmem>>, vector<32x128xf32>
      tpu.vector_store %arg10[%c0_110, %c0_111], %160 {strides = array<i32>} : memref<32x128xf32, #tpu.memory_space<vmem>>, vector<32x128xf32>,
    } else {
    }
    %c0 = arith.constant 0 : index
    %c0_1 = arith.constant 0 : index
    %c0_2 = arith.constant 0 : index
    %3 = vector.load %arg4[%c0, %c0_1, %c0_2] : memref<1x32x128xbf16, #tpu.memory_space<vmem>>, vector<1x32x128xbf16>
    %4 = vector.shape_cast %3 : vector<1x32x128xbf16> to vector<32x128xbf16>
    %c0_3 = arith.constant 0 : index
    %c128 = arith.constant 128 : index
    %5 = vector.load %arg5[%c0_3, %c128] : memref<128x384xbf16, #tpu.memory_space<vmem>>, vector<128x128xbf16>
    %cst = arith.constant dense<0.000000e+00> : vector<32x128xf32>
    %6 = tpu.matmul %4, %5, %cst {dimension_numbers = #tpu.dot_dimension_numbers<[1], [0], [0], [1], [0, 0, 1, 1], [], []>} : vector<32x128xbf16>, vector<128x128xbf16>, vector<32x128xf32> -> vector<32x128xf32>
    %7 = arith.truncf %6 : vector<32x128xf32> to vector<32x128xbf16>
    %c0_4 = arith.constant 0 : index
    %c0_5 = arith.constant 0 : index
    %c0_6 = arith.constant 0 : index
    %8 = vector.load %arg4[%c0_4, %c0_5, %c0_6] : memref<1x32x128xbf16, #tpu.memory_space<vmem>>, vector<1x32x128xbf16>
    %9 = vector.shape_cast %8 : vector<1x32x128xbf16> to vector<32x128xbf16>
    %c0_7 = arith.constant 0 : index
    %c256 = arith.constant 256 : index
    %10 = vector.load %arg5[%c0_7, %c256] : memref<128x384xbf16, #tpu.memory_space<vmem>>, vector<128x128xbf16>
    %cst_8 = arith.constant dense<0.000000e+00> : vector<32x128xf32>
    %11 = tpu.matmul %9, %10, %cst_8 {dimension_numbers = #tpu.dot_dimension_numbers<[1], [0], [0], [1], [0, 0, 1, 1], [], []>} : vector<32x128xbf16>, vector<128x128xbf16>, vector<32x128xf32> -> vector<32x128xf32>
    %12 = arith.truncf %11 : vector<32x128xf32> to vector<32x128xbf16>
    %c0_9 = arith.constant 0 : index
    %c0_10 = arith.constant 0 : index
    %13 = vector.load %arg9[%c0_9, %c0_10] : memref<32x128xbf16, #tpu.memory_space<vmem>>, vector<32x32xbf16>
    %14 = vector.extract_strided_slice %7 {offsets = [0, 0], sizes = [32, 32], strides = [1, 1]} : vector<32x128xbf16> to vector<32x32xbf16>
    %15 = vector.extract_strided_slice %12 {offsets = [0, 0], sizes = [32, 32], strides = [1, 1]} : vector<32x128xbf16> to vector<32x32xbf16>
    %cst_11 = arith.constant dense<0.000000e+00> : vector<32x32xf32>
    %16 = tpu.matmul %13, %14, %cst_11 {dimension_numbers = #tpu.dot_dimension_numbers<[1], [1], [0], [0], [0, 0, 1, 0], [], []>} : vector<32x32xbf16>, vector<32x32xbf16>, vector<32x32xf32> -> vector<32x32xf32>
    %c0_12 = arith.constant 0 : index
    %c0_13 = arith.constant 0 : index
    %c0_14 = arith.constant 0 : index
    %17 = vector.load %arg11[%c0_12, %c0_13, %c0_14] : memref<4x32x1xf32, #tpu.memory_space<vmem>>, vector<1x32x1xf32>
    %18 = vector.shape_cast %17 : vector<1x32x1xf32> to vector<32x1xf32>
    %cst_15 = arith.constant dense<0xFF800000> : vector<32xf32>
    %19 = vector.multi_reduction <maximumf>, %16, %cst_15 [1] : vector<32x32xf32> to vector<32xf32>
    %20 = vector.shape_cast %19 : vector<32xf32> to vector<32x1xf32>
    %21 = arith.maximumf %18, %20 : vector<32x1xf32>
    %22 = arith.subf %18, %21 : vector<32x1xf32>
    %23 = math.exp %22 : vector<32x1xf32>
    %24 = vector.broadcast %21 : vector<32x1xf32> to vector<32x32xf32>
    %25 = arith.subf %16, %24 : vector<32x32xf32>
    %26 = math.exp %25 : vector<32x32xf32>
    %c0_16 = arith.constant 0 : index
    %c0_17 = arith.constant 0 : index
    %c0_18 = arith.constant 0 : index
    %27 = vector.load %arg12[%c0_16, %c0_17, %c0_18] : memref<4x32x1xf32, #tpu.memory_space<vmem>>, vector<1x32x1xf32>
    %28 = vector.shape_cast %27 : vector<1x32x1xf32> to vector<32x1xf32>
    %29 = arith.mulf %23, %28 : vector<32x1xf32>
    %cst_19 = arith.constant dense<0.000000e+00> : vector<32xf32>
    %30 = vector.multi_reduction <add>, %26, %cst_19 [1] : vector<32x32xf32> to vector<32xf32>
    %31 = vector.shape_cast %30 : vector<32xf32> to vector<32x1xf32>
    %32 = arith.addf %29, %31 : vector<32x1xf32>
    %c0_20 = arith.constant 0 : index
    %c0_21 = arith.constant 0 : index
    %c0_22 = arith.constant 0 : index
    %33 = vector.load %arg12[%c0_20, %c0_21, %c0_22] : memref<4x32x1xf32, #tpu.memory_space<vmem>>, vector<1x32x1xf32>
    %34 = vector.shape_cast %33 : vector<1x32x1xf32> to vector<32x1xf32>
    %35 = vector.shape_cast %32 : vector<32x1xf32> to vector<1x32x1xf32>
    tpu.vector_store %arg12[%c0_20, %c0_21, %c0_22], %35 {strides = array<i32>} : memref<4x32x1xf32, #tpu.memory_space<vmem>>, vector<1x32x1xf32>,
    %c0_23 = arith.constant 0 : index
    %c0_24 = arith.constant 0 : index
    %36 = vector.load %arg10[%c0_23, %c0_24] : memref<32x128xf32, #tpu.memory_space<vmem>>, vector<32x32xf32>
    %37 = vector.broadcast %23 : vector<32x1xf32> to vector<32x32xf32>
    %38 = arith.mulf %37, %36 : vector<32x32xf32>
    %39 = arith.truncf %26 : vector<32x32xf32> to vector<32x32xbf16>
    %cst_25 = arith.constant dense<0.000000e+00> : vector<32x32xf32>
    %40 = tpu.matmul %39, %15, %cst_25 {dimension_numbers = #tpu.dot_dimension_numbers<[1], [0], [0], [1], [0, 0, 1, 1], [], []>} : vector<32x32xbf16>, vector<32x32xbf16>, vector<32x32xf32> -> vector<32x32xf32>
    %41 = arith.addf %38, %40 : vector<32x32xf32>
    %c0_26 = arith.constant 0 : index
    %c0_27 = arith.constant 0 : index
    %42 = vector.load %arg10[%c0_26, %c0_27] : memref<32x128xf32, #tpu.memory_space<vmem>>, vector<32x32xf32>
    tpu.vector_store %arg10[%c0_26, %c0_27], %41 {strides = array<i32>} : memref<32x128xf32, #tpu.memory_space<vmem>>, vector<32x32xf32>,
    %c0_28 = arith.constant 0 : index
    %c0_29 = arith.constant 0 : index
    %c0_30 = arith.constant 0 : index
    %43 = vector.load %arg11[%c0_28, %c0_29, %c0_30] : memref<4x32x1xf32, #tpu.memory_space<vmem>>, vector<1x32x1xf32>
    %44 = vector.shape_cast %43 : vector<1x32x1xf32> to vector<32x1xf32>
    %45 = vector.shape_cast %21 : vector<32x1xf32> to vector<1x32x1xf32>
    tpu.vector_store %arg11[%c0_28, %c0_29, %c0_30], %45 {strides = array<i32>} : memref<4x32x1xf32, #tpu.memory_space<vmem>>, vector<1x32x1xf32>,
    %c0_31 = arith.constant 0 : index
    %c32 = arith.constant 32 : index
    %46 = vector.load %arg9[%c0_31, %c32] : memref<32x128xbf16, #tpu.memory_space<vmem>>, vector<32x32xbf16>
    %47 = vector.extract_strided_slice %7 {offsets = [0, 32], sizes = [32, 32], strides = [1, 1]} : vector<32x128xbf16> to vector<32x32xbf16>
    %48 = vector.extract_strided_slice %12 {offsets = [0, 32], sizes = [32, 32], strides = [1, 1]} : vector<32x128xbf16> to vector<32x32xbf16>
    %cst_32 = arith.constant dense<0.000000e+00> : vector<32x32xf32>
    %49 = tpu.matmul %46, %47, %cst_32 {dimension_numbers = #tpu.dot_dimension_numbers<[1], [1], [0], [0], [0, 0, 1, 0], [], []>} : vector<32x32xbf16>, vector<32x32xbf16>, vector<32x32xf32> -> vector<32x32xf32>
    %c1 = arith.constant 1 : index
    %c0_33 = arith.constant 0 : index
    %c0_34 = arith.constant 0 : index
    %50 = vector.load %arg11[%c1, %c0_33, %c0_34] : memref<4x32x1xf32, #tpu.memory_space<vmem>>, vector<1x32x1xf32>
    %51 = vector.shape_cast %50 : vector<1x32x1xf32> to vector<32x1xf32>
    %cst_35 = arith.constant dense<0xFF800000> : vector<32xf32>
    %52 = vector.multi_reduction <maximumf>, %49, %cst_35 [1] : vector<32x32xf32> to vector<32xf32>
    %53 = vector.shape_cast %52 : vector<32xf32> to vector<32x1xf32>
    %54 = arith.maximumf %51, %53 : vector<32x1xf32>
    %55 = arith.subf %51, %54 : vector<32x1xf32>
    %56 = math.exp %55 : vector<32x1xf32>
    %57 = vector.broadcast %54 : vector<32x1xf32> to vector<32x32xf32>
    %58 = arith.subf %49, %57 : vector<32x32xf32>
    %59 = math.exp %58 : vector<32x32xf32>
    %c1_36 = arith.constant 1 : index
    %c0_37 = arith.constant 0 : index
    %c0_38 = arith.constant 0 : index
    %60 = vector.load %arg12[%c1_36, %c0_37, %c0_38] : memref<4x32x1xf32, #tpu.memory_space<vmem>>, vector<1x32x1xf32>
    %61 = vector.shape_cast %60 : vector<1x32x1xf32> to vector<32x1xf32>
    %62 = arith.mulf %56, %61 : vector<32x1xf32>
    %cst_39 = arith.constant dense<0.000000e+00> : vector<32xf32>
    %63 = vector.multi_reduction <add>, %59, %cst_39 [1] : vector<32x32xf32> to vector<32xf32>
    %64 = vector.shape_cast %63 : vector<32xf32> to vector<32x1xf32>
    %65 = arith.addf %62, %64 : vector<32x1xf32>
    %c1_40 = arith.constant 1 : index
    %c0_41 = arith.constant 0 : index
    %c0_42 = arith.constant 0 : index
    %66 = vector.load %arg12[%c1_40, %c0_41, %c0_42] : memref<4x32x1xf32, #tpu.memory_space<vmem>>, vector<1x32x1xf32>
    %67 = vector.shape_cast %66 : vector<1x32x1xf32> to vector<32x1xf32>
    %68 = vector.shape_cast %65 : vector<32x1xf32> to vector<1x32x1xf32>
    tpu.vector_store %arg12[%c1_40, %c0_41, %c0_42], %68 {strides = array<i32>} : memref<4x32x1xf32, #tpu.memory_space<vmem>>, vector<1x32x1xf32>,
    %c0_43 = arith.constant 0 : index
    %c32_44 = arith.constant 32 : index
    %69 = vector.load %arg10[%c0_43, %c32_44] : memref<32x128xf32, #tpu.memory_space<vmem>>, vector<32x32xf32>
    %70 = vector.broadcast %56 : vector<32x1xf32> to vector<32x32xf32>
    %71 = arith.mulf %70, %69 : vector<32x32xf32>
    %72 = arith.truncf %59 : vector<32x32xf32> to vector<32x32xbf16>
    %cst_45 = arith.constant dense<0.000000e+00> : vector<32x32xf32>
    %73 = tpu.matmul %72, %48, %cst_45 {dimension_numbers = #tpu.dot_dimension_numbers<[1], [0], [0], [1], [0, 0, 1, 1], [], []>} : vector<32x32xbf16>, vector<32x32xbf16>, vector<32x32xf32> -> vector<32x32xf32>
    %74 = arith.addf %71, %73 : vector<32x32xf32>
    %c0_46 = arith.constant 0 : index
    %c32_47 = arith.constant 32 : index
    %75 = vector.load %arg10[%c0_46, %c32_47] : memref<32x128xf32, #tpu.memory_space<vmem>>, vector<32x32xf32>
    tpu.vector_store %arg10[%c0_46, %c32_47], %74 {strides = array<i32>} : memref<32x128xf32, #tpu.memory_space<vmem>>, vector<32x32xf32>,
    %c1_48 = arith.constant 1 : index
    %c0_49 = arith.constant 0 : index
    %c0_50 = arith.constant 0 : index
    %76 = vector.load %arg11[%c1_48, %c0_49, %c0_50] : memref<4x32x1xf32, #tpu.memory_space<vmem>>, vector<1x32x1xf32>
    %77 = vector.shape_cast %76 : vector<1x32x1xf32> to vector<32x1xf32>
    %78 = vector.shape_cast %54 : vector<32x1xf32> to vector<1x32x1xf32>
    tpu.vector_store %arg11[%c1_48, %c0_49, %c0_50], %78 {strides = array<i32>} : memref<4x32x1xf32, #tpu.memory_space<vmem>>, vector<1x32x1xf32>,
    %c0_51 = arith.constant 0 : index
    %c64 = arith.constant 64 : index
    %79 = vector.load %arg9[%c0_51, %c64] : memref<32x128xbf16, #tpu.memory_space<vmem>>, vector<32x32xbf16>
    %80 = vector.extract_strided_slice %7 {offsets = [0, 64], sizes = [32, 32], strides = [1, 1]} : vector<32x128xbf16> to vector<32x32xbf16>
    %81 = vector.extract_strided_slice %12 {offsets = [0, 64], sizes = [32, 32], strides = [1, 1]} : vector<32x128xbf16> to vector<32x32xbf16>
    %cst_52 = arith.constant dense<0.000000e+00> : vector<32x32xf32>
    %82 = tpu.matmul %79, %80, %cst_52 {dimension_numbers = #tpu.dot_dimension_numbers<[1], [1], [0], [0], [0, 0, 1, 0], [], []>} : vector<32x32xbf16>, vector<32x32xbf16>, vector<32x32xf32> -> vector<32x32xf32>
    %c2 = arith.constant 2 : index
    %c0_53 = arith.constant 0 : index
    %c0_54 = arith.constant 0 : index
    %83 = vector.load %arg11[%c2, %c0_53, %c0_54] : memref<4x32x1xf32, #tpu.memory_space<vmem>>, vector<1x32x1xf32>
    %84 = vector.shape_cast %83 : vector<1x32x1xf32> to vector<32x1xf32>
    %cst_55 = arith.constant dense<0xFF800000> : vector<32xf32>
    %85 = vector.multi_reduction <maximumf>, %82, %cst_55 [1] : vector<32x32xf32> to vector<32xf32>
    %86 = vector.shape_cast %85 : vector<32xf32> to vector<32x1xf32>
    %87 = arith.maximumf %84, %86 : vector<32x1xf32>
    %88 = arith.subf %84, %87 : vector<32x1xf32>
    %89 = math.exp %88 : vector<32x1xf32>
    %90 = vector.broadcast %87 : vector<32x1xf32> to vector<32x32xf32>
    %91 = arith.subf %82, %90 : vector<32x32xf32>
    %92 = math.exp %91 : vector<32x32xf32>
    %c2_56 = arith.constant 2 : index
    %c0_57 = arith.constant 0 : index
    %c0_58 = arith.constant 0 : index
    %93 = vector.load %arg12[%c2_56, %c0_57, %c0_58] : memref<4x32x1xf32, #tpu.memory_space<vmem>>, vector<1x32x1xf32>
    %94 = vector.shape_cast %93 : vector<1x32x1xf32> to vector<32x1xf32>
    %95 = arith.mulf %89, %94 : vector<32x1xf32>
    %cst_59 = arith.constant dense<0.000000e+00> : vector<32xf32>
    %96 = vector.multi_reduction <add>, %92, %cst_59 [1] : vector<32x32xf32> to vector<32xf32>
    %97 = vector.shape_cast %96 : vector<32xf32> to vector<32x1xf32>
    %98 = arith.addf %95, %97 : vector<32x1xf32>
    %c2_60 = arith.constant 2 : index
    %c0_61 = arith.constant 0 : index
    %c0_62 = arith.constant 0 : index
    %99 = vector.load %arg12[%c2_60, %c0_61, %c0_62] : memref<4x32x1xf32, #tpu.memory_space<vmem>>, vector<1x32x1xf32>
    %100 = vector.shape_cast %99 : vector<1x32x1xf32> to vector<32x1xf32>
    %101 = vector.shape_cast %98 : vector<32x1xf32> to vector<1x32x1xf32>
    tpu.vector_store %arg12[%c2_60, %c0_61, %c0_62], %101 {strides = array<i32>} : memref<4x32x1xf32, #tpu.memory_space<vmem>>, vector<1x32x1xf32>,
    %c0_63 = arith.constant 0 : index
    %c64_64 = arith.constant 64 : index
    %102 = vector.load %arg10[%c0_63, %c64_64] : memref<32x128xf32, #tpu.memory_space<vmem>>, vector<32x32xf32>
    %103 = vector.broadcast %89 : vector<32x1xf32> to vector<32x32xf32>
    %104 = arith.mulf %103, %102 : vector<32x32xf32>
    %105 = arith.truncf %92 : vector<32x32xf32> to vector<32x32xbf16>
    %cst_65 = arith.constant dense<0.000000e+00> : vector<32x32xf32>
    %106 = tpu.matmul %105, %81, %cst_65 {dimension_numbers = #tpu.dot_dimension_numbers<[1], [0], [0], [1], [0, 0, 1, 1], [], []>} : vector<32x32xbf16>, vector<32x32xbf16>, vector<32x32xf32> -> vector<32x32xf32>
    %107 = arith.addf %104, %106 : vector<32x32xf32>
    %c0_66 = arith.constant 0 : index
    %c64_67 = arith.constant 64 : index
    %108 = vector.load %arg10[%c0_66, %c64_67] : memref<32x128xf32, #tpu.memory_space<vmem>>, vector<32x32xf32>
    tpu.vector_store %arg10[%c0_66, %c64_67], %107 {strides = array<i32>} : memref<32x128xf32, #tpu.memory_space<vmem>>, vector<32x32xf32>,
    %c2_68 = arith.constant 2 : index
    %c0_69 = arith.constant 0 : index
    %c0_70 = arith.constant 0 : index
    %109 = vector.load %arg11[%c2_68, %c0_69, %c0_70] : memref<4x32x1xf32, #tpu.memory_space<vmem>>, vector<1x32x1xf32>
    %110 = vector.shape_cast %109 : vector<1x32x1xf32> to vector<32x1xf32>
    %111 = vector.shape_cast %87 : vector<32x1xf32> to vector<1x32x1xf32>
    tpu.vector_store %arg11[%c2_68, %c0_69, %c0_70], %111 {strides = array<i32>} : memref<4x32x1xf32, #tpu.memory_space<vmem>>, vector<1x32x1xf32>,
    %c0_71 = arith.constant 0 : index
    %c96 = arith.constant 96 : index
    %112 = vector.load %arg9[%c0_71, %c96] : memref<32x128xbf16, #tpu.memory_space<vmem>>, vector<32x32xbf16>
    %113 = vector.extract_strided_slice %7 {offsets = [0, 96], sizes = [32, 32], strides = [1, 1]} : vector<32x128xbf16> to vector<32x32xbf16>
    %114 = vector.extract_strided_slice %12 {offsets = [0, 96], sizes = [32, 32], strides = [1, 1]} : vector<32x128xbf16> to vector<32x32xbf16>
    %cst_72 = arith.constant dense<0.000000e+00> : vector<32x32xf32>
    %115 = tpu.matmul %112, %113, %cst_72 {dimension_numbers = #tpu.dot_dimension_numbers<[1], [1], [0], [0], [0, 0, 1, 0], [], []>} : vector<32x32xbf16>, vector<32x32xbf16>, vector<32x32xf32> -> vector<32x32xf32>
    %c3 = arith.constant 3 : index
    %c0_73 = arith.constant 0 : index
    %c0_74 = arith.constant 0 : index
    %116 = vector.load %arg11[%c3, %c0_73, %c0_74] : memref<4x32x1xf32, #tpu.memory_space<vmem>>, vector<1x32x1xf32>
    %117 = vector.shape_cast %116 : vector<1x32x1xf32> to vector<32x1xf32>
    %cst_75 = arith.constant dense<0xFF800000> : vector<32xf32>
    %118 = vector.multi_reduction <maximumf>, %115, %cst_75 [1] : vector<32x32xf32> to vector<32xf32>
    %119 = vector.shape_cast %118 : vector<32xf32> to vector<32x1xf32>
    %120 = arith.maximumf %117, %119 : vector<32x1xf32>
    %121 = arith.subf %117, %120 : vector<32x1xf32>
    %122 = math.exp %121 : vector<32x1xf32>
    %123 = vector.broadcast %120 : vector<32x1xf32> to vector<32x32xf32>
    %124 = arith.subf %115, %123 : vector<32x32xf32>
    %125 = math.exp %124 : vector<32x32xf32>
    %c3_76 = arith.constant 3 : index
    %c0_77 = arith.constant 0 : index
    %c0_78 = arith.constant 0 : index
    %126 = vector.load %arg12[%c3_76, %c0_77, %c0_78] : memref<4x32x1xf32, #tpu.memory_space<vmem>>, vector<1x32x1xf32>
    %127 = vector.shape_cast %126 : vector<1x32x1xf32> to vector<32x1xf32>
    %128 = arith.mulf %122, %127 : vector<32x1xf32>
    %cst_79 = arith.constant dense<0.000000e+00> : vector<32xf32>
    %129 = vector.multi_reduction <add>, %125, %cst_79 [1] : vector<32x32xf32> to vector<32xf32>
    %130 = vector.shape_cast %129 : vector<32xf32> to vector<32x1xf32>
    %131 = arith.addf %128, %130 : vector<32x1xf32>
    %c3_80 = arith.constant 3 : index
    %c0_81 = arith.constant 0 : index
    %c0_82 = arith.constant 0 : index
    %132 = vector.load %arg12[%c3_80, %c0_81, %c0_82] : memref<4x32x1xf32, #tpu.memory_space<vmem>>, vector<1x32x1xf32>
    %133 = vector.shape_cast %132 : vector<1x32x1xf32> to vector<32x1xf32>
    %134 = vector.shape_cast %131 : vector<32x1xf32> to vector<1x32x1xf32>
    tpu.vector_store %arg12[%c3_80, %c0_81, %c0_82], %134 {strides = array<i32>} : memref<4x32x1xf32, #tpu.memory_space<vmem>>, vector<1x32x1xf32>,
    %c0_83 = arith.constant 0 : index
    %c96_84 = arith.constant 96 : index
    %135 = vector.load %arg10[%c0_83, %c96_84] : memref<32x128xf32, #tpu.memory_space<vmem>>, vector<32x32xf32>
    %136 = vector.broadcast %122 : vector<32x1xf32> to vector<32x32xf32>
    %137 = arith.mulf %136, %135 : vector<32x32xf32>
    %138 = arith.truncf %125 : vector<32x32xf32> to vector<32x32xbf16>
    %cst_85 = arith.constant dense<0.000000e+00> : vector<32x32xf32>
    %139 = tpu.matmul %138, %114, %cst_85 {dimension_numbers = #tpu.dot_dimension_numbers<[1], [0], [0], [1], [0, 0, 1, 1], [], []>} : vector<32x32xbf16>, vector<32x32xbf16>, vector<32x32xf32> -> vector<32x32xf32>
    %140 = arith.addf %137, %139 : vector<32x32xf32>
    %c0_86 = arith.constant 0 : index
    %c96_87 = arith.constant 96 : index
    %141 = vector.load %arg10[%c0_86, %c96_87] : memref<32x128xf32, #tpu.memory_space<vmem>>, vector<32x32xf32>
    tpu.vector_store %arg10[%c0_86, %c96_87], %140 {strides = array<i32>} : memref<32x128xf32, #tpu.memory_space<vmem>>, vector<32x32xf32>,
    %c3_88 = arith.constant 3 : index
    %c0_89 = arith.constant 0 : index
    %c0_90 = arith.constant 0 : index
    %142 = vector.load %arg11[%c3_88, %c0_89, %c0_90] : memref<4x32x1xf32, #tpu.memory_space<vmem>>, vector<1x32x1xf32>
    %143 = vector.shape_cast %142 : vector<1x32x1xf32> to vector<32x1xf32>
    %144 = vector.shape_cast %120 : vector<32x1xf32> to vector<1x32x1xf32>
    tpu.vector_store %arg11[%c3_88, %c0_89, %c0_90], %144 {strides = array<i32>} : memref<4x32x1xf32, #tpu.memory_space<vmem>>, vector<1x32x1xf32>,
    %c1_i32 = arith.constant 1 : i32
    %145 = arith.cmpi eq, %arg2, %c1_i32 : i32
    %146 = arith.extui %145 : i1 to i32
    %c0_i32_91 = arith.constant 0 : i32
    %147 = arith.cmpi ne, %146, %c0_i32_91 : i32
    scf.if %147 {
      %c0_92 = arith.constant 0 : index
      %c0_93 = arith.constant 0 : index
      %c0_94 = arith.constant 0 : index
      %148 = vector.load %arg12[%c0_92, %c0_93, %c0_94] : memref<4x32x1xf32, #tpu.memory_space<vmem>>, vector<1x32x1xf32>
      %149 = vector.shape_cast %148 : vector<1x32x1xf32> to vector<32x1xf32>
      %150 = tpu.reciprocal %149 {approx = true} : vector<32x1xf32> -> vector<32x1xf32>
      %c0_95 = arith.constant 0 : index
      %c0_96 = arith.constant 0 : index
      %151 = vector.load %arg10[%c0_95, %c0_96] : memref<32x128xf32, #tpu.memory_space<vmem>>, vector<32x32xf32>
      %152 = vector.broadcast %150 : vector<32x1xf32> to vector<32x32xf32>
      %153 = arith.mulf %151, %152 : vector<32x32xf32>
      %c0_97 = arith.constant 0 : index
      %c0_98 = arith.constant 0 : index
      %154 = vector.load %arg10[%c0_97, %c0_98] : memref<32x128xf32, #tpu.memory_space<vmem>>, vector<32x32xf32>
      tpu.vector_store %arg10[%c0_97, %c0_98], %153 {strides = array<i32>} : memref<32x128xf32, #tpu.memory_space<vmem>>, vector<32x32xf32>,
      %c1_99 = arith.constant 1 : index
      %c0_100 = arith.constant 0 : index
      %c0_101 = arith.constant 0 : index
      %155 = vector.load %arg12[%c1_99, %c0_100, %c0_101] : memref<4x32x1xf32, #tpu.memory_space<vmem>>, vector<1x32x1xf32>
      %156 = vector.shape_cast %155 : vector<1x32x1xf32> to vector<32x1xf32>
      %157 = tpu.reciprocal %156 {approx = true} : vector<32x1xf32> -> vector<32x1xf32>
      %c0_102 = arith.constant 0 : index
      %c32_103 = arith.constant 32 : index
      %158 = vector.load %arg10[%c0_102, %c32_103] : memref<32x128xf32, #tpu.memory_space<vmem>>, vector<32x32xf32>
      %159 = vector.broadcast %157 : vector<32x1xf32> to vector<32x32xf32>
      %160 = arith.mulf %158, %159 : vector<32x32xf32>
      %c0_104 = arith.constant 0 : index
      %c32_105 = arith.constant 32 : index
      %161 = vector.load %arg10[%c0_104, %c32_105] : memref<32x128xf32, #tpu.memory_space<vmem>>, vector<32x32xf32>
      tpu.vector_store %arg10[%c0_104, %c32_105], %160 {strides = array<i32>} : memref<32x128xf32, #tpu.memory_space<vmem>>, vector<32x32xf32>,
      %c2_106 = arith.constant 2 : index
      %c0_107 = arith.constant 0 : index
      %c0_108 = arith.constant 0 : index
      %162 = vector.load %arg12[%c2_106, %c0_107, %c0_108] : memref<4x32x1xf32, #tpu.memory_space<vmem>>, vector<1x32x1xf32>
      %163 = vector.shape_cast %162 : vector<1x32x1xf32> to vector<32x1xf32>
      %164 = tpu.reciprocal %163 {approx = true} : vector<32x1xf32> -> vector<32x1xf32>
      %c0_109 = arith.constant 0 : index
      %c64_110 = arith.constant 64 : index
      %165 = vector.load %arg10[%c0_109, %c64_110] : memref<32x128xf32, #tpu.memory_space<vmem>>, vector<32x32xf32>
      %166 = vector.broadcast %164 : vector<32x1xf32> to vector<32x32xf32>
      %167 = arith.mulf %165, %166 : vector<32x32xf32>
      %c0_111 = arith.constant 0 : index
      %c64_112 = arith.constant 64 : index
      %168 = vector.load %arg10[%c0_111, %c64_112] : memref<32x128xf32, #tpu.memory_space<vmem>>, vector<32x32xf32>
      tpu.vector_store %arg10[%c0_111, %c64_112], %167 {strides = array<i32>} : memref<32x128xf32, #tpu.memory_space<vmem>>, vector<32x32xf32>,
      %c3_113 = arith.constant 3 : index
      %c0_114 = arith.constant 0 : index
      %c0_115 = arith.constant 0 : index
      %169 = vector.load %arg12[%c3_113, %c0_114, %c0_115] : memref<4x32x1xf32, #tpu.memory_space<vmem>>, vector<1x32x1xf32>
      %170 = vector.shape_cast %169 : vector<1x32x1xf32> to vector<32x1xf32>
      %171 = tpu.reciprocal %170 {approx = true} : vector<32x1xf32> -> vector<32x1xf32>
      %c0_116 = arith.constant 0 : index
      %c96_117 = arith.constant 96 : index
      %172 = vector.load %arg10[%c0_116, %c96_117] : memref<32x128xf32, #tpu.memory_space<vmem>>, vector<32x32xf32>
      %173 = vector.broadcast %171 : vector<32x1xf32> to vector<32x32xf32>
      %174 = arith.mulf %172, %173 : vector<32x32xf32>
      %c0_118 = arith.constant 0 : index
      %c96_119 = arith.constant 96 : index
      %175 = vector.load %arg10[%c0_118, %c96_119] : memref<32x128xf32, #tpu.memory_space<vmem>>, vector<32x32xf32>
      tpu.vector_store %arg10[%c0_118, %c96_119], %174 {strides = array<i32>} : memref<32x128xf32, #tpu.memory_space<vmem>>, vector<32x32xf32>,
      %c0_120 = arith.constant 0 : index
      %c0_121 = arith.constant 0 : index
      %176 = vector.load %arg10[%c0_120, %c0_121] : memref<32x128xf32, #tpu.memory_space<vmem>>, vector<32x128xf32>
      %177 = arith.truncf %176 : vector<32x128xf32> to vector<32x128xbf16>
      %c0_122 = arith.constant 0 : index
      %c0_123 = arith.constant 0 : index
      %178 = vector.load %arg6[%c0_122, %c0_123] : memref<128x128xbf16, #tpu.memory_space<vmem>>, vector<128x128xbf16>
      %cst_124 = arith.constant dense<0.000000e+00> : vector<32x128xf32>
      %179 = tpu.matmul %177, %178, %cst_124 {dimension_numbers = #tpu.dot_dimension_numbers<[1], [0], [0], [1], [0, 0, 1, 1], [], []>} : vector<32x128xbf16>, vector<128x128xbf16>, vector<32x128xf32> -> vector<32x128xf32>
      %c0_125 = arith.constant 0 : index
      %c0_126 = arith.constant 0 : index
      %180 = vector.load %arg7[%c0_125, %c0_126] : memref<1x128xf32, #tpu.memory_space<vmem>>, vector<1x128xf32>
      %181 = vector.broadcast %180 : vector<1x128xf32> to vector<32x128xf32>
      %182 = arith.addf %179, %181 : vector<32x128xf32>
      %c0_127 = arith.constant 0 : index
      %c0_128 = arith.constant 0 : index
      %c0_129 = arith.constant 0 : index
      %183 = vector.load %arg8[%c0_127, %c0_128, %c0_129] : memref<1x32x128xf32, #tpu.memory_space<vmem>>, vector<1x32x128xf32>
      %184 = vector.shape_cast %183 : vector<1x32x128xf32> to vector<32x128xf32>
      %185 = vector.shape_cast %182 : vector<32x128xf32> to vector<1x32x128xf32>
      tpu.vector_store %arg8[%c0_127, %c0_128, %c0_129], %185 {strides = array<i32>} : memref<1x32x128xf32, #tpu.memory_space<vmem>>, vector<1x32x128xf32>,
    } else {
    }
    return
  }
  func.func @transform_0(%arg0: i32, %arg1: i32, %arg2: i32) -> (i32, i32, i32) {
    %c0_i32 = arith.constant 0 : i32
    %c0_i32_0 = arith.constant 0 : i32
    return %arg0, %arg1, %c0_i32 : i32, i32, i32
  }
  func.func @transform_1(%arg0: i32, %arg1: i32, %arg2: i32) -> (i32, i32, i32) {
    %c0_i32 = arith.constant 0 : i32
    %c0_i32_0 = arith.constant 0 : i32
    return %arg0, %arg2, %c0_i32 : i32, i32, i32
  }
  func.func @transform_2(%arg0: i32, %arg1: i32, %arg2: i32) -> (i32, i32) {
    %c0_i32 = arith.constant 0 : i32
    %c0_i32_0 = arith.constant 0 : i32
    %c0_i32_1 = arith.constant 0 : i32
    return %c0_i32, %c0_i32_0 : i32, i32
  }
  func.func @transform_3(%arg0: i32, %arg1: i32, %arg2: i32) -> (i32, i32) {
    %c0_i32 = arith.constant 0 : i32
    %c0_i32_0 = arith.constant 0 : i32
    %c0_i32_1 = arith.constant 0 : i32
    return %c0_i32, %c0_i32_0 : i32, i32
  }
  func.func @transform_4(%arg0: i32, %arg1: i32, %arg2: i32) -> (i32, i32) {
    %c0_i32 = arith.constant 0 : i32
    %c0_i32_0 = arith.constant 0 : i32
    %c0_i32_1 = arith.constant 0 : i32
    return %c0_i32, %c0_i32_0 : i32, i32
  }
  func.func @transform_5(%arg0: i32, %arg1: i32, %arg2: i32) -> (i32, i32, i32) {
    %c0_i32 = arith.constant 0 : i32
    %c0_i32_0 = arith.constant 0 : i32
    return %arg0, %arg1, %c0_i32 : i32, i32, i32
  }
}

</mosaic_0001>

<llo_original>
// kernel: tpu_custom_call.1
$region0: #{tpu_custom_call.1}
  #allocation0 [shape = 'u32[]', space=smem, size = 0x4, offset = 0x4, fixed_abs, tag = 'smem constant byte address 0x4 - core index']
  #allocation1 [shape = 'u32[144,128]{1,0:T(1,128)}', space=vmem, size = 0x12000, scoped, tag = 'internal scratch']
  #allocation2 [shape = 'bf16[32,128]{1,0:T(16,128)(2,1)}', space=vmem, size = 0x2000, scoped, tag = 'scratch operand']
  #allocation3 [shape = 'f32[32,128]{1,0:T(8,128)}', space=vmem, size = 0x4000, scoped, tag = 'scratch operand']
  #allocation4 [shape = 'f32[4,32,1]{2,1,0:T(8,128)}', space=vmem, size = 0x10000, scoped, tag = 'scratch operand']
  #allocation5 [shape = 'f32[4,32,1]{2,1,0:T(8,128)}', space=vmem, size = 0x10000, scoped, tag = 'scratch operand']
  %s0 = inlined_call_operand.hbm [shape: bf16[2,64,128], index: 0, kind: input, shape index: {}]
  %s1 = inlined_call_operand.hbm [shape: bf16[2,64,128], index: 1, kind: input, shape index: {}]
  %s2 = inlined_call_operand.hbm [shape: bf16[128,384], index: 2, kind: input, shape index: {}]
  %s3 = inlined_call_operand.hbm [shape: bf16[128,128], index: 3, kind: input, shape index: {}]
  %s4 = inlined_call_operand.vmem [shape: f32[1,128], index: 4, kind: input, shape index: {}]
  %s5 = inlined_call_operand.hbm [shape: f32[2,64,128], index: 5, kind: output, shape index: {}]
  %s6 = sld [smem:[#allocation0]]
  $region77: #{tpu_custom_call.1} parent=0
    _
  %s8 = ssub.s32 1, %s6
  %s9 = scalar_select 0, %s8, %s6
  $region1: #{tpu_custom_call.1} parent=0
    #allocation6 [shape = 'u8[16384]{0}', space=vmem, size = 0x4000, scoped, tag = 'input window, operand 0']
    #allocation7 [shape = 's32[2]{0}', space=sflag, size = 0x8, scoped, tag = 'scoped memory for tpu_custom_call.1']
    #allocation8 [shape = 's32[2]{0}', space=sflag, size = 0x8, scoped, tag = 'scoped memory for tpu_custom_call.1']
    #allocation9 [shape = 'u8[16384]{0}', space=vmem, size = 0x4000, scoped, tag = 'input window, operand 1']
    #allocation10 [shape = 's32[2]{0}', space=sflag, size = 0x8, scoped, tag = 'scoped memory for tpu_custom_call.1']
    #allocation11 [shape = 'u8[98304]{0}', space=vmem, size = 0x18000, scoped, tag = 'input window, operand 2, single buffered']
    #allocation12 [shape = 'u8[32768]{0}', space=vmem, size = 0x8000, scoped, tag = 'input window, operand 3, single buffered']
    #allocation13 [shape = 's32[1]{0}', space=sflag, size = 0x4, scoped, tag = 'scoped memory for tpu_custom_call.1']
    #allocation14 [shape = 'u8[32768]{0}', space=vmem, size = 0x8000, scoped, tag = 'output window, operand 0']
    %10 = vsyncpa [#allocation7], 0
    %s11 = scalar_lea.sflag [#allocation7], 1
    %12 = vsyncpa %s11, 0
    %13 = vsyncpa [#allocation10], 0
    %s14 = scalar_lea.sflag [#allocation10], 1
    %15 = vsyncpa %s14, 0
    %16 = vsyncpa [#allocation13], 0
    %17 = vsyncpa [#allocation8], 0
    %s18 = scalar_lea.sflag [#allocation8], 1
    %19 = vsyncpa %s18, 0
    loop: start=0, step=1, limit=10
    $region2: #{tpu_custom_call.1} parent=1 // loop_pre_header
      _
    $region3: #{tpu_custom_call.1} parent=1 // loop_header
      %s21 = sphi 0, %s25
      %p22 = scmp.ge.s32.totalorder %s21, 10
      %s28 = sphi 0, %s47
      %s29 = sphi 0, %s43
      %s30 = sphi 0, %s39
      %s31 = sphi 0, %s28
      %s32 = sphi 0, %s29
      %s33 = sphi 0, %s30
      %s34 = sphi 0, %s31
      %s35 = sphi 0, %s32
      %s36 = sphi 0, %s33
      %s52 = sphi 0, %s54
      %s55 = sphi 0, %s52
      %s56 = sphi 0, %s55
      %s72 = sphi 0, %s56
      %s80 = sphi 0, %s82
      %s83 = sphi 0, %s80
      %s84 = sphi 0, %s83
      %s100 = sphi 0, %s84
      %s104 = sphi 0, %s104
      %s106 = sphi 0, %s104
      %s107 = sphi 0, %s106
      %s121 = sphi 0, %s107
      %s125 = sphi 0, %s125
      %s127 = sphi 0, %s125
      %s128 = sphi 0, %s127
      %s142 = sphi 0, %s128
      %s146 = sphi 0, %s146
      %s148 = sphi 0, %s146
      %s149 = sphi 0, %s148
      %s163 = sphi 0, %s149
      %s171 = sphi 0, %s173
      %s174 = sphi 0, %s171
      %s175 = sphi 0, %s174
      %s191 = sphi 0, %s175
    $region4: #{tpu_custom_call.1} parent=1 // loop_header_branch
      %24 = sbr.rel (%p22) target = $region8
    $region5: #{tpu_custom_call.1} parent=1 // loop_body
      %s26 = ssub.s32 %s21, 1
      %s27 = ssub.s32 %s21, 2
      %s37 = sadd.s32 1, %s30
      %p38 = scmp.ge.s32.totalorder %s37, 2
      %s39 = scalar_select %p38, 0, %s37
      %s40 = sadd.s32 1, %s29
      %s41 = scalar_select %p38, %s40, %s29
      %p42 = scmp.ge.s32.totalorder %s41, 2
      %s43 = scalar_select %p42, 0, %s41
      %s44 = sadd.s32 1, %s28
      %s45 = scalar_select %p42, %s44, %s28
      %p46 = scmp.ge.s32.totalorder %s45, 2
      %s47 = scalar_select %p46, 0, %s45
      %s48 = ssub.s32 %s28, %s47
      %s49 = ssub.s32 %s29, %s43
      %s50 = sor.u32 %s48, %s49
      %p51 = scmp.eq.s32.totalorder %s50, 0
      %s53 = sadd.s32 %s52, 1
      %s54 = scalar_select %p51, %s52, %s53
      %p57 = pneg %p51
      %p58 = scmp.eq.s32.totalorder %s21, 7
      %p59 = por %p57, %p58
      %p60 = scmp.ne.s32.totalorder %s52, %s55
      %p61 = scmp.eq.s32.totalorder %s21, 0
      %p62 = por %p60, %p61
      %p63 = scmp.ne.s32.totalorder %s52, %s55
      %p64 = scmp.eq.s32.totalorder %s26, 7
      %p65 = por %p63, %p64
      %p66 = scmp.ne.s32.totalorder %s55, %s56
      %p67 = scmp.eq.s32.totalorder %s26, 0
      %p68 = por %p66, %p67
      %p69 = scmp.ne.s32.totalorder %s55, %s56
      %p70 = scmp.eq.s32.totalorder %s27, 7
      %p71 = por %p69, %p70
      %p73 = scmp.ne.s32.totalorder %s56, %s72
      %p74 = scmp.eq.s32.totalorder %s27, 0
      %p75 = por %p73, %p74
      %s76 = ssub.s32 %s28, %s47
      %s77 = ssub.s32 %s30, %s39
      %s78 = sor.u32 %s76, %s77
      %p79 = scmp.eq.s32.totalorder %s78, 0
      %s81 = sadd.s32 %s80, 1
      %s82 = scalar_select %p79, %s80, %s81
      %p85 = pneg %p79
      %p86 = scmp.eq.s32.totalorder %s21, 7
      %p87 = por %p85, %p86
      %p88 = scmp.ne.s32.totalorder %s80, %s83
      %p89 = scmp.eq.s32.totalorder %s21, 0
      %p90 = por %p88, %p89
      %p91 = scmp.ne.s32.totalorder %s80, %s83
      %p92 = scmp.eq.s32.totalorder %s26, 7
      %p93 = por %p91, %p92
      %p94 = scmp.ne.s32.totalorder %s83, %s84
      %p95 = scmp.eq.s32.totalorder %s26, 0
      %p96 = por %p94, %p95
      %p97 = scmp.ne.s32.totalorder %s83, %s84
      %p98 = scmp.eq.s32.totalorder %s27, 7
      %p99 = por %p97, %p98
      %p101 = scmp.ne.s32.totalorder %s84, %s100
      %p102 = scmp.eq.s32.totalorder %s27, 0
      %p103 = por %p101, %p102
      %s105 = sadd.s32 %s104, 1
      %p108 = scmp.eq.s32.totalorder %s21, 7
      %p109 = scmp.ne.s32.totalorder %s104, %s106
      %p110 = scmp.eq.s32.totalorder %s21, 0
      %p111 = por %p109, %p110
      %p112 = scmp.ne.s32.totalorder %s104, %s106
      %p113 = scmp.eq.s32.totalorder %s26, 7
      %p114 = por %p112, %p113
      %p115 = scmp.ne.s32.totalorder %s106, %s107
      %p116 = scmp.eq.s32.totalorder %s26, 0
      %p117 = por %p115, %p116
      %p118 = scmp.ne.s32.totalorder %s106, %s107
      %p119 = scmp.eq.s32.totalorder %s27, 7
      %p120 = por %p118, %p119
      %p122 = scmp.ne.s32.totalorder %s107, %s121
      %p123 = scmp.eq.s32.totalorder %s27, 0
      %p124 = por %p122, %p123
      %s126 = sadd.s32 %s125, 1
      %p129 = scmp.eq.s32.totalorder %s21, 7
      %p130 = scmp.ne.s32.totalorder %s125, %s127
      %p131 = scmp.eq.s32.totalorder %s21, 0
      %p132 = por %p130, %p131
      %p133 = scmp.ne.s32.totalorder %s125, %s127
      %p134 = scmp.eq.s32.totalorder %s26, 7
      %p135 = por %p133, %p134
      %p136 = scmp.ne.s32.totalorder %s127, %s128
      %p137 = scmp.eq.s32.totalorder %s26, 0
      %p138 = por %p136, %p137
      %p139 = scmp.ne.s32.totalorder %s127, %s128
      %p140 = scmp.eq.s32.totalorder %s27, 7
      %p141 = por %p139, %p140
      %p143 = scmp.ne.s32.totalorder %s128, %s142
      %p144 = scmp.eq.s32.totalorder %s27, 0
      %p145 = por %p143, %p144
      %s147 = sadd.s32 %s146, 1
      %p150 = scmp.eq.s32.totalorder %s21, 7
      %p151 = scmp.ne.s32.totalorder %s146, %s148
      %p152 = scmp.eq.s32.totalorder %s21, 0
      %p153 = por %p151, %p152
      %p154 = scmp.ne.s32.totalorder %s146, %s148
      %p155 = scmp.eq.s32.totalorder %s26, 7
      %p156 = por %p154, %p155
      %p157 = scmp.ne.s32.totalorder %s148, %s149
      %p158 = scmp.eq.s32.totalorder %s26, 0
      %p159 = por %p157, %p158
      %p160 = scmp.ne.s32.totalorder %s148, %s149
      %p161 = scmp.eq.s32.totalorder %s27, 7
      %p162 = por %p160, %p161
      %p164 = scmp.ne.s32.totalorder %s149, %s163
      %p165 = scmp.eq.s32.totalorder %s27, 0
      %p166 = por %p164, %p165
      %s167 = ssub.s32 %s28, %s47
      %s168 = ssub.s32 %s29, %s43
      %s169 = sor.u32 %s167, %s168
      %p170 = scmp.eq.s32.totalorder %s169, 0
      %s172 = sadd.s32 %s171, 1
      %s173 = scalar_select %p170, %s171, %s172
      %p176 = pneg %p170
      %p177 = scmp.eq.s32.totalorder %s21, 7
      %p178 = por %p176, %p177
      %p179 = scmp.ne.s32.totalorder %s171, %s174
      %p180 = scmp.eq.s32.totalorder %s21, 0
      %p181 = por %p179, %p180
      %p182 = scmp.ne.s32.totalorder %s171, %s174
      %p183 = scmp.eq.s32.totalorder %s26, 7
      %p184 = por %p182, %p183
      %p185 = scmp.ne.s32.totalorder %s174, %s175
      %p186 = scmp.eq.s32.totalorder %s26, 0
      %p187 = por %p185, %p186
      %p188 = scmp.ne.s32.totalorder %s174, %s175
      %p189 = scmp.eq.s32.totalorder %s27, 7
      %p190 = por %p188, %p189
      %p192 = scmp.ne.s32.totalorder %s175, %s191
      %p193 = scmp.eq.s32.totalorder %s27, 0
      %p194 = por %p192, %p193
      %p195 = scmp.le.s32.totalorder 1, %s21
      %p196 = scmp.lt.s32.totalorder %s21, 9
      %p197 = pnand %p195, %p196
      %p198 = pneg %p197
      // Predicated region
      $region9: #{tpu_custom_call.1} parent=5 // pred_check
        _
      $region10: #{tpu_custom_call.1} parent=5 // pred_check_branch
        %200 = sbr.rel (%p197) target = $region12
      $region11: #{tpu_custom_call.1} parent=5 // pred_region
        %s201 = ssub.s32 %s21, 1
        // Predicated region
        $region13: #{tpu_custom_call.1} parent=11 // pred_check
          %p202 = pneg %p117
        $region14: #{tpu_custom_call.1} parent=11 // pred_check_branch
          %204 = sbr.rel (%p202) target = $region16
        $region15: #{tpu_custom_call.1} parent=11 // pred_region
          %s206 = ssub.s32 3072, 3072
          %207 = vsyncadd [#allocation10], %s206
          %s208 = sshll.u32 [#allocation11], 4
          %s209 = int_to_ptr.vmem [resolvable:$true] %s208
          %214 = dma.hbm_to_vmem [thread:$0]  %s2, 3072, %s209, [#allocation10], 192, 192, 12
        $region16: #{tpu_custom_call.1} parent=11 // pred_fallthru
          _
        // Predicated region
        $region17: #{tpu_custom_call.1} parent=11 // pred_check
          %p215 = pneg %p138
        $region18: #{tpu_custom_call.1} parent=11 // pred_check_branch
          %217 = sbr.rel (%p215) target = $region20
        $region19: #{tpu_custom_call.1} parent=11 // pred_region
          %s219 = ssub.s32 1024, 1024
          %220 = vsyncadd [#allocation13], %s219
          %s221 = sshll.u32 [#allocation12], 4
          %s222 = int_to_ptr.vmem [resolvable:$true] %s221
          %227 = dma.hbm_to_vmem [thread:$0]  %s3, 1024, %s222, [#allocation13], 64, 64, 4
        $region20: #{tpu_custom_call.1} parent=11 // pred_fallthru
          _
        // Predicated region
        $region21: #{tpu_custom_call.1} parent=11 // pred_check
          %p228 = pneg %p159
        $region22: #{tpu_custom_call.1} parent=11 // pred_check_branch
          %230 = sbr.rel (%p228) target = $region24
        $region23: #{tpu_custom_call.1} parent=11 // pred_region
          _
        $region24: #{tpu_custom_call.1} parent=11 // pred_fallthru
          _
      $region12: #{tpu_custom_call.1} parent=5 // pred_fallthru
        _
      %p231 = scmp.lt.s32.totalorder %s21, 8
      // Predicated region
      $region25: #{tpu_custom_call.1} parent=5 // pred_check
        %p232 = pneg %p231
      $region26: #{tpu_custom_call.1} parent=5 // pred_check_branch
        %234 = sbr.rel (%p232) target = $region28
      $region27: #{tpu_custom_call.1} parent=5 // pred_region
        // Predicated region
        $region29: #{tpu_custom_call.1} parent=27 // pred_check
          %p235 = pneg %p62
        $region30: #{tpu_custom_call.1} parent=27 // pred_check_branch
          %237 = sbr.rel (%p235) target = $region32
        $region31: #{tpu_custom_call.1} parent=27 // pred_region
          %s238 = sand.u32 %s52, 1
          %s239 = scalar_lea.sflag [#allocation7], %s238
          %s240 = sand.u32 %s52, 1
          %s241 = smul.addr %s240, 16
          %s242 = scalar_lea.vmem [#allocation6], %s241
          %s243 = smul.u32 4, %s29
          %s245 = ssub.s32 256, 256
          %246 = vsyncadd %s239, %s245
          %s247 = smul.addr %s28, 8
          %s248 = sadd.s32 %s243, %s247
          %s249 = smul.addr %s248, 64
          %s250 = scalar_lea.hbm %s0, %s249
          %s251 = sshll.u32 %s242, 4
          %s252 = int_to_ptr.vmem [resolvable:$true] %s251
          %257 = dma.hbm_to_vmem [thread:$0]  %s250, 256, %s252, %s239, 64, 64, 4
        $region32: #{tpu_custom_call.1} parent=27 // pred_fallthru
          _
        // Predicated region
        $region33: #{tpu_custom_call.1} parent=27 // pred_check
          %p258 = pneg %p90
        $region34: #{tpu_custom_call.1} parent=27 // pred_check_branch
          %260 = sbr.rel (%p258) target = $region36
        $region35: #{tpu_custom_call.1} parent=27 // pred_region
          %s261 = sand.u32 %s21, 1
          %s262 = scalar_lea.sflag [#allocation10], %s261
          %s263 = sand.u32 %s80, 1
          %s264 = smul.addr %s263, 16
          %s265 = scalar_lea.vmem [#allocation9], %s264
          %s266 = smul.u32 4, %s30
          %s268 = ssub.s32 256, 256
          %269 = vsyncadd %s262, %s268
          %s270 = smul.addr %s28, 8
          %s271 = sadd.s32 %s266, %s270
          %s272 = smul.addr %s271, 64
          %s273 = scalar_lea.hbm %s1, %s272
          %s274 = sshll.u32 %s265, 4
          %s275 = int_to_ptr.vmem [resolvable:$true] %s274
          %280 = dma.hbm_to_vmem [thread:$0]  %s273, 256, %s275, %s262, 64, 64, 4
        $region36: #{tpu_custom_call.1} parent=27 // pred_fallthru
          _
      $region28: #{tpu_custom_call.1} parent=5 // pred_fallthru
        _
      %p281 = scmp.le.s32.totalorder 1, %s21
      %p282 = scmp.lt.s32.totalorder %s21, 9
      %p283 = pnand %p281, %p282
      %p284 = pneg %p283
      // Predicated region
      $region37: #{tpu_custom_call.1} parent=5 // pred_check
        _
      $region38: #{tpu_custom_call.1} parent=5 // pred_check_branch
        %286 = sbr.rel (%p283) target = $region40
      $region39: #{tpu_custom_call.1} parent=5 // pred_region
        %s287 = ssub.s32 %s21, 1
        %s288 = sand.u32 %s55, 1
        %s289 = scalar_lea.sflag [#allocation7], %s288
        %s290 = sand.u32 %s55, 1
        %s291 = smul.addr %s290, 16
        %s292 = scalar_lea.vmem [#allocation6], %s291
        // Predicated region
        $region41: #{tpu_custom_call.1} parent=39 // pred_check
          %p293 = pneg %p68
        $region42: #{tpu_custom_call.1} parent=39 // pred_check_branch
          %295 = sbr.rel (%p293) target = $region44
        $region43: #{tpu_custom_call.1} parent=39 // pred_region
          %296 = dma.done %s289, 256
        $region44: #{tpu_custom_call.1} parent=39 // pred_fallthru
          _
        %s297 = sand.u32 %s26, 1
        %s298 = scalar_lea.sflag [#allocation10], %s297
        %s299 = sand.u32 %s83, 1
        %s300 = smul.addr %s299, 16
        %s301 = scalar_lea.vmem [#allocation9], %s300
        // Predicated region
        $region45: #{tpu_custom_call.1} parent=39 // pred_check
          %p302 = pneg %p96
        $region46: #{tpu_custom_call.1} parent=39 // pred_check_branch
          %304 = sbr.rel (%p302) target = $region48
        $region47: #{tpu_custom_call.1} parent=39 // pred_region
          %305 = dma.done %s298, 256
        $region48: #{tpu_custom_call.1} parent=39 // pred_fallthru
          _
        // Predicated region
        $region49: #{tpu_custom_call.1} parent=39 // pred_check
          %p306 = pneg %p117
        $region50: #{tpu_custom_call.1} parent=39 // pred_check_branch
          %308 = sbr.rel (%p306) target = $region52
        $region51: #{tpu_custom_call.1} parent=39 // pred_region
          %309 = dma.done [#allocation10], 3072
        $region52: #{tpu_custom_call.1} parent=39 // pred_fallthru
          _
        // Predicated region
        $region53: #{tpu_custom_call.1} parent=39 // pred_check
          %p310 = pneg %p138
        $region54: #{tpu_custom_call.1} parent=39 // pred_check_branch
          %312 = sbr.rel (%p310) target = $region56
        $region55: #{tpu_custom_call.1} parent=39 // pred_region
          %313 = dma.done [#allocation13], 1024
        $region56: #{tpu_custom_call.1} parent=39 // pred_fallthru
          _
        %s314 = sand.u32 %s55, 1
        %s315 = scalar_lea.sflag [#allocation7], %s314
        %s316 = sand.u32 %s55, 1
        %s317 = smul.addr %s316, 16
        %s318 = scalar_lea.vmem [#allocation6], %s317
        %p319 = pneg %p68
        %p320 = pneg %p65
        %s321 = sand.u32 %s26, 1
        %s322 = scalar_lea.sflag [#allocation10], %s321
        %s323 = sand.u32 %s83, 1
        %s324 = smul.addr %s323, 16
        %s325 = scalar_lea.vmem [#allocation9], %s324
        %p326 = pneg %p96
        %p327 = pneg %p93
        %p328 = pneg %p117
        %p329 = pneg %p114
        %p330 = pneg %p138
        %p331 = pneg %p135
        %p332 = pneg %p159
        %p333 = pneg %p156
        %p334 = pneg %p187
        %p335 = pneg %p184
        %s336 = sand.u32 %s174, 1
        %s337 = scalar_lea.sflag [#allocation8], %s336
        %s338 = sand.u32 %s174, 1
        %s339 = smul.addr %s338, 32
        %s340 = scalar_lea.vmem [#allocation14], %s339
        %s341 = smul.u32 4, %s32
        %s342 = smul.u32 4, %s33
        %s343 = smul.u32 4, %s32
        %p345 = scmp.eq.s32.totalorder %s33, 0
        // Predicated region
        $region57: #{tpu_custom_call.1} parent=39 // pred_check
          %p346 = pneg %p345
        $region58: #{tpu_custom_call.1} parent=39 // pred_check_branch
          %348 = sbr.rel (%p346) target = $region60
        $region59: #{tpu_custom_call.1} parent=39 // pred_region
          %v349 = vld [vmem:[%s292] sm:$0xf]
          %v350 = vld [vmem:[%s292 + $0x4] sm:$0xf]
          %v351 = vld [vmem:[%s292 + $0x8] sm:$0xf]
          %v352 = vld [vmem:[%s292 + $0xc] sm:$0xf]
          %v353 = vld [vmem:[#allocation11] sm:$0xf]
          %v354 = vld [vmem:[#allocation11 + $0xc] sm:$0xf]
          %v355 = vld [vmem:[#allocation11 + $0x18] sm:$0xf]
          %v356 = vld [vmem:[#allocation11 + $0x24] sm:$0xf]
          %v357 = vld [vmem:[#allocation11 + $0x30] sm:$0xf]
          %v358 = vld [vmem:[#allocation11 + $0x3c] sm:$0xf]
          %v359 = vld [vmem:[#allocation11 + $0x48] sm:$0xf]
          %v360 = vld [vmem:[#allocation11 + $0x54] sm:$0xf]
          %v361 = vld [vmem:[#allocation11 + $0x60] sm:$0xf]
          %v362 = vld [vmem:[#allocation11 + $0x6c] sm:$0xf]
          %v363 = vld [vmem:[#allocation11 + $0x78] sm:$0xf]
          %v364 = vld [vmem:[#allocation11 + $0x84] sm:$0xf]
          %v365 = vld [vmem:[#allocation11 + $0x90] sm:$0xf]
          %v366 = vld [vmem:[#allocation11 + $0x9c] sm:$0xf]
          %v367 = vld [vmem:[#allocation11 + $0xa8] sm:$0xf]
          %v368 = vld [vmem:[#allocation11 + $0xb4] sm:$0xf]
          %v373 = vunpack.c.l.b16 %v349
          %v374 = vunpack.c.l.b16 %v350
          %v375 = vunpack.c.l.b16 %v351
          %v376 = vunpack.c.l.b16 %v352
          %v377 = vpack.c.b16 %v374, %v373
          %v378 = vpack.c.b16 %v376, %v375
          %v397 = vunpack.c.l.b16 %v353
          %v398 = vunpack.c.l.b16 %v354
          %v399 = vunpack.c.l.b16 %v355
          %v400 = vunpack.c.l.b16 %v356
          %v401 = vunpack.c.l.b16 %v357
          %v402 = vunpack.c.l.b16 %v358
          %v403 = vunpack.c.l.b16 %v359
          %v404 = vunpack.c.l.b16 %v360
          %v405 = vunpack.c.l.b16 %v361
          %v406 = vunpack.c.l.b16 %v362
          %v407 = vunpack.c.l.b16 %v363
          %v408 = vunpack.c.l.b16 %v364
          %v409 = vunpack.c.l.b16 %v365
          %v410 = vunpack.c.l.b16 %v366
          %v411 = vunpack.c.l.b16 %v367
          %v412 = vunpack.c.l.b16 %v368
          %v413 = vpack.c.b16 %v398, %v397
          %v414 = vpack.c.b16 %v400, %v399
          %v415 = vpack.c.b16 %v402, %v401
          %v416 = vpack.c.b16 %v404, %v403
          %v417 = vpack.c.b16 %v406, %v405
          %v418 = vpack.c.b16 %v408, %v407
          %v419 = vpack.c.b16 %v410, %v409
          %v420 = vpack.c.b16 %v412, %v411
          %429 = vmatprep.subr.bf16.mxu0 0
          %430 = vmatpush1.bf16.msra.mxu0 %v413
          %431 = vmatprep.subr.bf16.mxu0 0
          %432 = vmatpush1.bf16.msra.mxu0 %v414
          %433 = vmatprep.subr.bf16.mxu0 0
          %434 = vmatpush1.bf16.msra.mxu0 %v415
          %435 = vmatprep.subr.bf16.mxu0 0
          %436 = vmatpush1.bf16.msra.mxu0 %v416
          %437 = vmatprep.subr.bf16.mxu0 0
          %438 = vmatpush1.bf16.msra.mxu0 %v417
          %439 = vmatprep.subr.bf16.mxu0 0
          %440 = vmatpush1.bf16.msra.mxu0 %v418
          %441 = vmatprep.subr.bf16.mxu0 0
          %442 = vmatpush1.bf16.msra.mxu0 %v419
          %443 = vmatprep.subr.bf16.mxu0 0
          %444 = vmatpush1.bf16.msra.mxu0 %v420
          %445 = vmatprep.subr.bf16.mxu0 0
          %446 = vmatpush1.bf16.msra.mxu0 0
          %447 = vmatprep.subr.bf16.mxu0 0
          %448 = vmatpush1.bf16.msra.mxu0 0
          %449 = vmatprep.subr.bf16.mxu0 0
          %450 = vmatpush1.bf16.msra.mxu0 0
          %451 = vmatprep.subr.bf16.mxu0 0
          %452 = vmatpush1.bf16.msra.mxu0 0
          %453 = vmatprep.subr.bf16.mxu0 0
          %454 = vmatpush1.bf16.msra.mxu0 0
          %455 = vmatprep.subr.bf16.mxu0 0
          %456 = vmatpush1.bf16.msra.mxu0 0
          %457 = vmatprep.subr.bf16.mxu0 0
          %458 = vmatpush1.bf16.msra.mxu0 0
          %459 = vmatprep.subr.bf16.mxu0 0
          %460 = vmatpush1.bf16.msra.mxu0 0
          %461 = vmatprep.mubr.bf16.mxu0 0
          %462 = vmatmul.mubr.bf16.gmra.mrb[0].mxu0 %v377
          %v463 = vpop.f32.mrb[0].mxu0
          %v464 = vadd.f32 0.0, %v463
          %v465 = vpop.f32.mrb[0].mxu0
          %v466 = vpop.f32.mrb[0].mxu0
          %v467 = vadd.f32 0.0, %v466
          %v468 = vpop.f32.mrb[0].mxu0
          %469 = vmatprep.mubr.bf16.mxu0 0
          %470 = vmatmul.mubr.bf16.gmra.mrb[0].mxu0 %v378
          %v471 = vpop.f32.mrb[0].mxu0
          %v472 = vadd.f32 0.0, %v471
          %v473 = vpop.f32.mrb[0].mxu0
          %v474 = vpop.f32.mrb[0].mxu0
          %v475 = vadd.f32 0.0, %v474
          %v476 = vpop.f32.mrb[0].mxu0
          %477 = vdwg.mxu0
          %v478 = vmul.f32 %v464, 0.17677669
          %v479 = vmul.f32 %v467, 0.17677669
          %v480 = vmul.f32 %v472, 0.17677669
          %v481 = vmul.f32 %v475, 0.17677669
          %v482 = vpack.c.bf16 %v479, %v478
          %v483 = vpack.c.bf16 %v481, %v480
          %484 = vst [vmem:[#allocation2] sm:$0xff] %v482
          %485 = vst [vmem:[#allocation2 + $0x8] sm:$0xff] %v483
          %vm486 = vcmask 7168
          %487 = vst.msk [vmem:[#allocation4] sm:$0xff] %vm486, -inf
          %488 = vst.msk [vmem:[#allocation4 + $0x8] sm:$0xff] %vm486, -inf
          %489 = vst.msk [vmem:[#allocation4 + $0x10] sm:$0xff] %vm486, -inf
          %490 = vst.msk [vmem:[#allocation4 + $0x18] sm:$0xff] %vm486, -inf
          %491 = vst.msk [vmem:[#allocation4 + $0x20] sm:$0xff] %vm486, -inf
          %492 = vst.msk [vmem:[#allocation4 + $0x28] sm:$0xff] %vm486, -inf
          %493 = vst.msk [vmem:[#allocation4 + $0x30] sm:$0xff] %vm486, -inf
          %494 = vst.msk [vmem:[#allocation4 + $0x38] sm:$0xff] %vm486, -inf
          %495 = vst.msk [vmem:[#allocation4 + $0x40] sm:$0xff] %vm486, -inf
          %496 = vst.msk [vmem:[#allocation4 + $0x48] sm:$0xff] %vm486, -inf
          %497 = vst.msk [vmem:[#allocation4 + $0x50] sm:$0xff] %vm486, -inf
          %498 = vst.msk [vmem:[#allocation4 + $0x58] sm:$0xff] %vm486, -inf
          %499 = vst.msk [vmem:[#allocation4 + $0x60] sm:$0xff] %vm486, -inf
          %500 = vst.msk [vmem:[#allocation4 + $0x68] sm:$0xff] %vm486, -inf
          %501 = vst.msk [vmem:[#allocation4 + $0x70] sm:$0xff] %vm486, -inf
          %502 = vst.msk [vmem:[#allocation4 + $0x78] sm:$0xff] %vm486, -inf
          %503 = vst.msk [vmem:[#allocation5] sm:$0xff] %vm486, 0.0
          %504 = vst.msk [vmem:[#allocation5 + $0x8] sm:$0xff] %vm486, 0.0
          %505 = vst.msk [vmem:[#allocation5 + $0x10] sm:$0xff] %vm486, 0.0
          %506 = vst.msk [vmem:[#allocation5 + $0x18] sm:$0xff] %vm486, 0.0
          %507 = vst.msk [vmem:[#allocation5 + $0x20] sm:$0xff] %vm486, 0.0
          %508 = vst.msk [vmem:[#allocation5 + $0x28] sm:$0xff] %vm486, 0.0
          %509 = vst.msk [vmem:[#allocation5 + $0x30] sm:$0xff] %vm486, 0.0
          %510 = vst.msk [vmem:[#allocation5 + $0x38] sm:$0xff] %vm486, 0.0
          %511 = vst.msk [vmem:[#allocation5 + $0x40] sm:$0xff] %vm486, 0.0
          %512 = vst.msk [vmem:[#allocation5 + $0x48] sm:$0xff] %vm486, 0.0
          %513 = vst.msk [vmem:[#allocation5 + $0x50] sm:$0xff] %vm486, 0.0
          %514 = vst.msk [vmem:[#allocation5 + $0x58] sm:$0xff] %vm486, 0.0
          %515 = vst.msk [vmem:[#allocation5 + $0x60] sm:$0xff] %vm486, 0.0
          %516 = vst.msk [vmem:[#allocation5 + $0x68] sm:$0xff] %vm486, 0.0
          %517 = vst.msk [vmem:[#allocation5 + $0x70] sm:$0xff] %vm486, 0.0
          %518 = vst.msk [vmem:[#allocation5 + $0x78] sm:$0xff] %vm486, 0.0
          %519 = vst [vmem:[#allocation3] sm:$0xff] 0.0
          %520 = vst [vmem:[#allocation3 + $0x8] sm:$0xff] 0.0
          %521 = vst [vmem:[#allocation3 + $0x10] sm:$0xff] 0.0
          %522 = vst [vmem:[#allocation3 + $0x18] sm:$0xff] 0.0
        $region60: #{tpu_custom_call.1} parent=39 // pred_fallthru
          _
        %v523 = vld [vmem:[%s301] sm:$0xf]
        %v524 = vld [vmem:[%s301 + $0x4] sm:$0xf]
        %v525 = vld [vmem:[%s301 + $0x8] sm:$0xf]
        %v526 = vld [vmem:[%s301 + $0xc] sm:$0xf]
        %v527 = vld [vmem:[#allocation11 + $0x4] sm:$0xf]
        %v528 = vld [vmem:[#allocation11 + $0x10] sm:$0xf]
        %v529 = vld [vmem:[#allocation11 + $0x1c] sm:$0xf]
        %v530 = vld [vmem:[#allocation11 + $0x28] sm:$0xf]
        %v531 = vld [vmem:[#allocation11 + $0x34] sm:$0xf]
        %v532 = vld [vmem:[#allocation11 + $0x40] sm:$0xf]
        %v533 = vld [vmem:[#allocation11 + $0x4c] sm:$0xf]
        %v534 = vld [vmem:[#allocation11 + $0x58] sm:$0xf]
        %v535 = vld [vmem:[#allocation11 + $0x64] sm:$0xf]
        %v536 = vld [vmem:[#allocation11 + $0x70] sm:$0xf]
        %v537 = vld [vmem:[#allocation11 + $0x7c] sm:$0xf]
        %v538 = vld [vmem:[#allocation11 + $0x88] sm:$0xf]
        %v539 = vld [vmem:[#allocation11 + $0x94] sm:$0xf]
        %v540 = vld [vmem:[#allocation11 + $0xa0] sm:$0xf]
        %v541 = vld [vmem:[#allocation11 + $0xac] sm:$0xf]
        %v542 = vld [vmem:[#allocation11 + $0xb8] sm:$0xf]
        %v547 = vunpack.c.l.b16 %v523
        %v548 = vunpack.c.l.b16 %v524
        %v549 = vunpack.c.l.b16 %v525
        %v550 = vunpack.c.l.b16 %v526
        %v551 = vpack.c.b16 %v548, %v547
        %v552 = vpack.c.b16 %v550, %v549
        %v571 = vunpack.c.l.b16 %v527
        %v572 = vunpack.c.l.b16 %v528
        %v573 = vunpack.c.l.b16 %v529
        %v574 = vunpack.c.l.b16 %v530
        %v575 = vunpack.c.l.b16 %v531
        %v576 = vunpack.c.l.b16 %v532
        %v577 = vunpack.c.l.b16 %v533
        %v578 = vunpack.c.l.b16 %v534
        %v579 = vunpack.c.l.b16 %v535
        %v580 = vunpack.c.l.b16 %v536
        %v581 = vunpack.c.l.b16 %v537
        %v582 = vunpack.c.l.b16 %v538
        %v583 = vunpack.c.l.b16 %v539
        %v584 = vunpack.c.l.b16 %v540
        %v585 = vunpack.c.l.b16 %v541
        %v586 = vunpack.c.l.b16 %v542
        %v587 = vpack.c.b16 %v572, %v571
        %v588 = vpack.c.b16 %v574, %v573
        %v589 = vpack.c.b16 %v576, %v575
        %v590 = vpack.c.b16 %v578, %v577
        %v591 = vpack.c.b16 %v580, %v579
        %v592 = vpack.c.b16 %v582, %v581
        %v593 = vpack.c.b16 %v584, %v583
        %v594 = vpack.c.b16 %v586, %v585
        %603 = vmatprep.subr.bf16.mxu0 0
        %604 = vmatpush1.bf16.msra.mxu0 %v587
        %605 = vmatprep.subr.bf16.mxu0 0
        %606 = vmatpush1.bf16.msra.mxu0 %v588
        %607 = vmatprep.subr.bf16.mxu0 0
        %608 = vmatpush1.bf16.msra.mxu0 %v589
        %609 = vmatprep.subr.bf16.mxu0 0
        %610 = vmatpush1.bf16.msra.mxu0 %v590
        %611 = vmatprep.subr.bf16.mxu0 0
        %612 = vmatpush1.bf16.msra.mxu0 %v591
        %613 = vmatprep.subr.bf16.mxu0 0
        %614 = vmatpush1.bf16.msra.mxu0 %v592
        %615 = vmatprep.subr.bf16.mxu0 0
        %616 = vmatpush1.bf16.msra.mxu0 %v593
        %617 = vmatprep.subr.bf16.mxu0 0
        %618 = vmatpush1.bf16.msra.mxu0 %v594
        %619 = vmatprep.subr.bf16.mxu0 0
        %620 = vmatpush1.bf16.msra.mxu0 0
        %621 = vmatprep.subr.bf16.mxu0 0
        %622 = vmatpush1.bf16.msra.mxu0 0
        %623 = vmatprep.subr.bf16.mxu0 0
        %624 = vmatpush1.bf16.msra.mxu0 0
        %625 = vmatprep.subr.bf16.mxu0 0
        %626 = vmatpush1.bf16.msra.mxu0 0
        %627 = vmatprep.subr.bf16.mxu0 0
        %628 = vmatpush1.bf16.msra.mxu0 0
        %629 = vmatprep.subr.bf16.mxu0 0
        %630 = vmatpush1.bf16.msra.mxu0 0
        %631 = vmatprep.subr.bf16.mxu0 0
        %632 = vmatpush1.bf16.msra.mxu0 0
        %633 = vmatprep.subr.bf16.mxu0 0
        %634 = vmatpush1.bf16.msra.mxu0 0
        %635 = vmatprep.mubr.bf16.mxu0 0
        %636 = vmatmul.mubr.bf16.gmra.mrb[0].mxu0 %v551
        %v637 = vpop.f32.mrb[0].mxu0
        %v638 = vadd.f32 0.0, %v637
        %v639 = vpop.f32.mrb[0].mxu0
        %v640 = vpop.f32.mrb[0].mxu0
        %v641 = vadd.f32 0.0, %v640
        %v642 = vpop.f32.mrb[0].mxu0
        %643 = vmatprep.mubr.bf16.mxu0 0
        %644 = vmatmul.mubr.bf16.gmra.mrb[0].mxu0 %v552
        %v645 = vpop.f32.mrb[0].mxu0
        %v646 = vadd.f32 0.0, %v645
        %v647 = vpop.f32.mrb[0].mxu0
        %v648 = vpop.f32.mrb[0].mxu0
        %v649 = vadd.f32 0.0, %v648
        %v650 = vpop.f32.mrb[0].mxu0
        %651 = vdwg.mxu0
        %v652 = vpack.c.bf16 %v641, %v638
        %v653 = vpack.c.bf16 %v649, %v646
        %v654 = vld [vmem:[#allocation11 + $0x8] sm:$0xf]
        %v655 = vld [vmem:[#allocation11 + $0x14] sm:$0xf]
        %v656 = vld [vmem:[#allocation11 + $0x20] sm:$0xf]
        %v657 = vld [vmem:[#allocation11 + $0x2c] sm:$0xf]
        %v658 = vld [vmem:[#allocation11 + $0x38] sm:$0xf]
        %v659 = vld [vmem:[#allocation11 + $0x44] sm:$0xf]
        %v660 = vld [vmem:[#allocation11 + $0x50] sm:$0xf]
        %v661 = vld [vmem:[#allocation11 + $0x5c] sm:$0xf]
        %v662 = vld [vmem:[#allocation11 + $0x68] sm:$0xf]
        %v663 = vld [vmem:[#allocation11 + $0x74] sm:$0xf]
        %v664 = vld [vmem:[#allocation11 + $0x80] sm:$0xf]
        %v665 = vld [vmem:[#allocation11 + $0x8c] sm:$0xf]
        %v666 = vld [vmem:[#allocation11 + $0x98] sm:$0xf]
        %v667 = vld [vmem:[#allocation11 + $0xa4] sm:$0xf]
        %v668 = vld [vmem:[#allocation11 + $0xb0] sm:$0xf]
        %v669 = vld [vmem:[#allocation11 + $0xbc] sm:$0xf]
        %v686 = vunpack.c.l.b16 %v654
        %v687 = vunpack.c.l.b16 %v655
        %v688 = vunpack.c.l.b16 %v656
        %v689 = vunpack.c.l.b16 %v657
        %v690 = vunpack.c.l.b16 %v658
        %v691 = vunpack.c.l.b16 %v659
        %v692 = vunpack.c.l.b16 %v660
        %v693 = vunpack.c.l.b16 %v661
        %v694 = vunpack.c.l.b16 %v662
        %v695 = vunpack.c.l.b16 %v663
        %v696 = vunpack.c.l.b16 %v664
        %v697 = vunpack.c.l.b16 %v665
        %v698 = vunpack.c.l.b16 %v666
        %v699 = vunpack.c.l.b16 %v667
        %v700 = vunpack.c.l.b16 %v668
        %v701 = vunpack.c.l.b16 %v669
        %v702 = vpack.c.b16 %v687, %v686
        %v703 = vpack.c.b16 %v689, %v688
        %v704 = vpack.c.b16 %v691, %v690
        %v705 = vpack.c.b16 %v693, %v692
        %v706 = vpack.c.b16 %v695, %v694
        %v707 = vpack.c.b16 %v697, %v696
        %v708 = vpack.c.b16 %v699, %v698
        %v709 = vpack.c.b16 %v701, %v700
        %718 = vmatprep.subr.bf16.mxu0 0
        %719 = vmatpush1.bf16.msra.mxu0 %v702
        %720 = vmatprep.subr.bf16.mxu0 0
        %721 = vmatpush1.bf16.msra.mxu0 %v703
        %722 = vmatprep.subr.bf16.mxu0 0
        %723 = vmatpush1.bf16.msra.mxu0 %v704
        %724 = vmatprep.subr.bf16.mxu0 0
        %725 = vmatpush1.bf16.msra.mxu0 %v705
        %726 = vmatprep.subr.bf16.mxu0 0
        %727 = vmatpush1.bf16.msra.mxu0 %v706
        %728 = vmatprep.subr.bf16.mxu0 0
        %729 = vmatpush1.bf16.msra.mxu0 %v707
        %730 = vmatprep.subr.bf16.mxu0 0
        %731 = vmatpush1.bf16.msra.mxu0 %v708
        %732 = vmatprep.subr.bf16.mxu0 0
        %733 = vmatpush1.bf16.msra.mxu0 %v709
        %734 = vmatprep.subr.bf16.mxu0 0
        %735 = vmatpush1.bf16.msra.mxu0 0
        %736 = vmatprep.subr.bf16.mxu0 0
        %737 = vmatpush1.bf16.msra.mxu0 0
        %738 = vmatprep.subr.bf16.mxu0 0
        %739 = vmatpush1.bf16.msra.mxu0 0
        %740 = vmatprep.subr.bf16.mxu0 0
        %741 = vmatpush1.bf16.msra.mxu0 0
        %742 = vmatprep.subr.bf16.mxu0 0
        %743 = vmatpush1.bf16.msra.mxu0 0
        %744 = vmatprep.subr.bf16.mxu0 0
        %745 = vmatpush1.bf16.msra.mxu0 0
        %746 = vmatprep.subr.bf16.mxu0 0
        %747 = vmatpush1.bf16.msra.mxu0 0
        %748 = vmatprep.subr.bf16.mxu0 0
        %749 = vmatpush1.bf16.msra.mxu0 0
        %750 = vmatprep.mubr.bf16.mxu0 0
        %751 = vmatmul.mubr.bf16.gmra.mrb[0].mxu0 %v551
        %v752 = vpop.f32.mrb[0].mxu0
        %v753 = vadd.f32 0.0, %v752
        %v754 = vpop.f32.mrb[0].mxu0
        %v755 = vpop.f32.mrb[0].mxu0
        %v756 = vadd.f32 0.0, %v755
        %v757 = vpop.f32.mrb[0].mxu0
        %758 = vmatprep.mubr.bf16.mxu0 0
        %759 = vmatmul.mubr.bf16.gmra.mrb[0].mxu0 %v552
        %v760 = vpop.f32.mrb[0].mxu0
        %v761 = vadd.f32 0.0, %v760
        %v762 = vpop.f32.mrb[0].mxu0
        %v763 = vpop.f32.mrb[0].mxu0
        %v764 = vadd.f32 0.0, %v763
        %v765 = vpop.f32.mrb[0].mxu0
        %766 = vdwg.mxu0
        %v767 = vpack.c.bf16 %v756, %v753
        %v768 = vpack.c.bf16 %v764, %v761
        %v769 = vld [vmem:[#allocation2] sm:$0xff]
        %v770 = vld [vmem:[#allocation2 + $0x8] sm:$0xff]
        %vm771 = vcmask 261120
        %v773 = vsel %vm771, %v769, 0
        %v776 = vsel %vm771, %v770, 0
        %v779 = vsel %vm771, %v652, 0
        %v782 = vsel %vm771, %v653, 0
        %784 = vmatprep.subr.bf16.mxu0 0
        %785 = vmatpush1.bf16.xpose.msra.mxu0 %v779
        %786 = vmatprep.subr.bf16.mxu0 0
        %787 = vmatpush1.bf16.xpose.msra.mxu0 %v782
        %788 = vmatprep.subr.bf16.mxu0 0
        %789 = vmatpush1.bf16.xpose.msra.mxu0 0
        %790 = vmatprep.subr.bf16.mxu0 0
        %791 = vmatpush1.bf16.xpose.msra.mxu0 0
        %792 = vmatprep.subr.bf16.mxu0 0
        %793 = vmatpush1.bf16.xpose.msra.mxu0 0
        %794 = vmatprep.subr.bf16.mxu0 0
        %795 = vmatpush1.bf16.xpose.msra.mxu0 0
        %796 = vmatprep.subr.bf16.mxu0 0
        %797 = vmatpush1.bf16.xpose.msra.mxu0 0
        %798 = vmatprep.subr.bf16.mxu0 0
        %799 = vmatpush1.bf16.xpose.msra.mxu0 0
        %800 = vmatprep.subr.bf16.mxu0 0
        %801 = vmatpush1.bf16.xpose.msra.mxu0 0
        %802 = vmatprep.subr.bf16.mxu0 0
        %803 = vmatpush1.bf16.xpose.msra.mxu0 0
        %804 = vmatprep.subr.bf16.mxu0 0
        %805 = vmatpush1.bf16.xpose.msra.mxu0 0
        %806 = vmatprep.subr.bf16.mxu0 0
        %807 = vmatpush1.bf16.xpose.msra.mxu0 0
        %808 = vmatprep.subr.bf16.mxu0 0
        %809 = vmatpush1.bf16.xpose.msra.mxu0 0
        %810 = vmatprep.subr.bf16.mxu0 0
        %811 = vmatpush1.bf16.xpose.msra.mxu0 0
        %812 = vmatprep.subr.bf16.mxu0 0
        %813 = vmatpush1.bf16.xpose.msra.mxu0 0
        %814 = vmatprep.subr.bf16.mxu0 0
        %815 = vmatpush1.bf16.xpose.msra.mxu0 0
        %816 = vmatprep.mubr.bf16.mxu0 0
        %817 = vmatmul.mubr.bf16.gmra.mrb[0].mxu0 %v773
        %v818 = vpop.f32.mrb[0].mxu0
        %v819 = vadd.f32 0.0, %v818
        %v820 = vpop.f32.mrb[0].mxu0
        %v821 = vpop.f32.mrb[0].mxu0
        %v822 = vadd.f32 0.0, %v821
        %v823 = vpop.f32.mrb[0].mxu0
        %824 = vmatprep.mubr.bf16.mxu0 0
        %825 = vmatmul.mubr.bf16.gmra.mrb[0].mxu0 %v776
        %v826 = vpop.f32.mrb[0].mxu0
        %v827 = vadd.f32 0.0, %v826
        %v828 = vpop.f32.mrb[0].mxu0
        %v829 = vpop.f32.mrb[0].mxu0
        %v830 = vadd.f32 0.0, %v829
        %v831 = vpop.f32.mrb[0].mxu0
        %832 = vdwg.mxu0
        %v833 = vld [vmem:[#allocation4] sm:$0xff]
        %v834 = vld [vmem:[#allocation4 + $0x8] sm:$0xff]
        %v835 = vld [vmem:[#allocation4 + $0x10] sm:$0xff]
        %v836 = vld [vmem:[#allocation4 + $0x18] sm:$0xff]
        %v837 = vsel %vm771, %v819, -inf
        %838 = vmax.xlane.f32.xlu0 %v837
        %v839 = vpop.xlane.xlu0 %838
        %v840 = vsel %vm771, %v822, -inf
        %841 = vmax.xlane.f32.xlu0 %v840
        %v842 = vpop.xlane.xlu0 %841
        %v843 = vsel %vm771, %v827, -inf
        %844 = vmax.xlane.f32.xlu0 %v843
        %v845 = vpop.xlane.xlu0 %844
        %v846 = vsel %vm771, %v830, -inf
        %847 = vmax.xlane.f32.xlu0 %v846
        %v848 = vpop.xlane.xlu0 %847
        %v849 = vmax.f32 %v833, %v839
        %v850 = vmax.f32 %v834, %v842
        %v851 = vmax.f32 %v835, %v845
        %v852 = vmax.f32 %v836, %v848
        %v853 = vsub.f32 %v833, %v849
        %v854 = vsub.f32 %v834, %v850
        %v855 = vsub.f32 %v835, %v851
        %v856 = vsub.f32 %v836, %v852
        %v857 = vmul.f32 %v853, 1.442695
        %v858 = vpow.pop %v857
        %v859 = vmul.f32 %v854, 1.442695
        %v860 = vpow.pop %v859
        %v861 = vmul.f32 %v855, 1.442695
        %v862 = vpow.pop %v861
        %v863 = vmul.f32 %v856, 1.442695
        %v864 = vpow.pop %v863
        %866 = vset.pattern.permute.xlu0 0
        %867 = vperm.xlu0 %866, %v849
        %v868 = vpop.permute.xlu0 %867
        %871 = vset.pattern.permute.xlu0 0
        %872 = vperm.xlu0 %871, %v850
        %v873 = vpop.permute.xlu0 %872
        %876 = vset.pattern.permute.xlu0 0
        %877 = vperm.xlu0 %876, %v851
        %v878 = vpop.permute.xlu0 %877
        %881 = vset.pattern.permute.xlu0 0
        %882 = vperm.xlu0 %881, %v852
        %v883 = vpop.permute.xlu0 %882
        %v885 = vsub.f32 %v819, %v868
        %v886 = vsub.f32 %v822, %v873
        %v887 = vsub.f32 %v827, %v878
        %v888 = vsub.f32 %v830, %v883
        %v889 = vmul.f32 %v885, 1.442695
        %v890 = vpow.pop %v889
        %v891 = vmul.f32 %v886, 1.442695
        %v892 = vpow.pop %v891
        %v893 = vmul.f32 %v887, 1.442695
        %v894 = vpow.pop %v893
        %v895 = vmul.f32 %v888, 1.442695
        %v896 = vpow.pop %v895
        %v897 = vld [vmem:[#allocation5] sm:$0xff]
        %v898 = vld [vmem:[#allocation5 + $0x8] sm:$0xff]
        %v899 = vld [vmem:[#allocation5 + $0x10] sm:$0xff]
        %v900 = vld [vmem:[#allocation5 + $0x18] sm:$0xff]
        %v901 = vmul.f32 %v858, %v897
        %v902 = vmul.f32 %v860, %v898
        %v903 = vmul.f32 %v862, %v899
        %v904 = vmul.f32 %v864, %v900
        %v905 = vsel %vm771, %v890, 0.0
        %906 = vadd.xlane.f32.xlu0 %v905
        %v907 = vpop.xlane.xlu0 %906
        %v908 = vsel %vm771, %v892, 0.0
        %909 = vadd.xlane.f32.xlu0 %v908
        %v910 = vpop.xlane.xlu0 %909
        %v911 = vsel %vm771, %v894, 0.0
        %912 = vadd.xlane.f32.xlu0 %v911
        %v913 = vpop.xlane.xlu0 %912
        %v914 = vsel %vm771, %v896, 0.0
        %915 = vadd.xlane.f32.xlu0 %v914
        %v916 = vpop.xlane.xlu0 %915
        %v917 = vadd.f32 %v901, %v907
        %v918 = vadd.f32 %v902, %v910
        %v919 = vadd.f32 %v903, %v913
        %v920 = vadd.f32 %v904, %v916
        %vm921 = vcmask 7168
        %922 = vst.msk [vmem:[#allocation5] sm:$0xff] %vm921, %v917
        %923 = vst.msk [vmem:[#allocation5 + $0x8] sm:$0xff] %vm921, %v918
        %924 = vst.msk [vmem:[#allocation5 + $0x10] sm:$0xff] %vm921, %v919
        %925 = vst.msk [vmem:[#allocation5 + $0x18] sm:$0xff] %vm921, %v920
        %v926 = vld [vmem:[#allocation3] sm:$0xff]
        %v927 = vld [vmem:[#allocation3 + $0x8] sm:$0xff]
        %v928 = vld [vmem:[#allocation3 + $0x10] sm:$0xff]
        %v929 = vld [vmem:[#allocation3 + $0x18] sm:$0xff]
        %931 = vset.pattern.permute.xlu0 0
        %932 = vperm.xlu0 %931, %v858
        %v933 = vpop.permute.xlu0 %932
        %936 = vset.pattern.permute.xlu0 0
        %937 = vperm.xlu0 %936, %v860
        %v938 = vpop.permute.xlu0 %937
        %941 = vset.pattern.permute.xlu0 0
        %942 = vperm.xlu0 %941, %v862
        %v943 = vpop.permute.xlu0 %942
        %946 = vset.pattern.permute.xlu0 0
        %947 = vperm.xlu0 %946, %v864
        %v948 = vpop.permute.xlu0 %947
        %v950 = vmul.f32 %v933, %v926
        %v951 = vmul.f32 %v938, %v927
        %v952 = vmul.f32 %v943, %v928
        %v953 = vmul.f32 %v948, %v929
        %v954 = vpack.c.bf16 %v892, %v890
        %v955 = vpack.c.bf16 %v896, %v894
        %v957 = vsel %vm771, %v954, 0
        %v960 = vsel %vm771, %v955, 0
        %962 = vmatprep.subr.bf16.mxu0 0
        %963 = vmatpush1.bf16.msra.mxu0 %v767
        %964 = vmatprep.subr.bf16.mxu0 0
        %965 = vmatpush1.bf16.msra.mxu0 %v768
        %966 = vmatprep.subr.bf16.mxu0 0
        %967 = vmatpush1.bf16.msra.mxu0 0
        %968 = vmatprep.subr.bf16.mxu0 0
        %969 = vmatpush1.bf16.msra.mxu0 0
        %970 = vmatprep.subr.bf16.mxu0 0
        %971 = vmatpush1.bf16.msra.mxu0 0
        %972 = vmatprep.subr.bf16.mxu0 0
        %973 = vmatpush1.bf16.msra.mxu0 0
        %974 = vmatprep.subr.bf16.mxu0 0
        %975 = vmatpush1.bf16.msra.mxu0 0
        %976 = vmatprep.subr.bf16.mxu0 0
        %977 = vmatpush1.bf16.msra.mxu0 0
        %978 = vmatprep.subr.bf16.mxu0 0
        %979 = vmatpush1.bf16.msra.mxu0 0
        %980 = vmatprep.subr.bf16.mxu0 0
        %981 = vmatpush1.bf16.msra.mxu0 0
        %982 = vmatprep.subr.bf16.mxu0 0
        %983 = vmatpush1.bf16.msra.mxu0 0
        %984 = vmatprep.subr.bf16.mxu0 0
        %985 = vmatpush1.bf16.msra.mxu0 0
        %986 = vmatprep.subr.bf16.mxu0 0
        %987 = vmatpush1.bf16.msra.mxu0 0
        %988 = vmatprep.subr.bf16.mxu0 0
        %989 = vmatpush1.bf16.msra.mxu0 0
        %990 = vmatprep.subr.bf16.mxu0 0
        %991 = vmatpush1.bf16.msra.mxu0 0
        %992 = vmatprep.subr.bf16.mxu0 0
        %993 = vmatpush1.bf16.msra.mxu0 0
        %994 = vmatprep.mubr.bf16.mxu0 0
        %995 = vmatmul.mubr.bf16.gmra.mrb[0].mxu0 %v957
        %v996 = vpop.f32.mrb[0].mxu0
        %v997 = vadd.f32 0.0, %v996
        %v998 = vpop.f32.mrb[0].mxu0
        %v999 = vpop.f32.mrb[0].mxu0
        %v1000 = vadd.f32 0.0, %v999
        %v1001 = vpop.f32.mrb[0].mxu0
        %1002 = vmatprep.mubr.bf16.mxu0 0
        %1003 = vmatmul.mubr.bf16.gmra.mrb[0].mxu0 %v960
        %v1004 = vpop.f32.mrb[0].mxu0
        %v1005 = vadd.f32 0.0, %v1004
        %v1006 = vpop.f32.mrb[0].mxu0
        %v1007 = vpop.f32.mrb[0].mxu0
        %v1008 = vadd.f32 0.0, %v1007
        %v1009 = vpop.f32.mrb[0].mxu0
        %1010 = vdwg.mxu0
        %v1011 = vadd.f32 %v950, %v997
        %v1012 = vadd.f32 %v951, %v1000
        %v1013 = vadd.f32 %v952, %v1005
        %v1014 = vadd.f32 %v953, %v1008
        %1015 = vst.msk [vmem:[#allocation3] sm:$0xff] %vm771, %v1011
        %1016 = vst.msk [vmem:[#allocation3 + $0x8] sm:$0xff] %vm771, %v1012
        %1017 = vst.msk [vmem:[#allocation3 + $0x10] sm:$0xff] %vm771, %v1013
        %1018 = vst.msk [vmem:[#allocation3 + $0x18] sm:$0xff] %vm771, %v1014
        %1019 = vst.msk [vmem:[#allocation4] sm:$0xff] %vm921, %v849
        %1020 = vst.msk [vmem:[#allocation4 + $0x8] sm:$0xff] %vm921, %v850
        %1021 = vst.msk [vmem:[#allocation4 + $0x10] sm:$0xff] %vm921, %v851
        %1022 = vst.msk [vmem:[#allocation4 + $0x18] sm:$0xff] %vm921, %v852
        %v1023 = vld [vmem:[#allocation2] sm:$0xff]
        %v1024 = vld [vmem:[#allocation2 + $0x8] sm:$0xff]
        %1027 = vrot.lane.b32.xlu0 %v1023, 96
        %v1028 = vpop.permute.xlu0 %1027
        %1029 = vrot.lane.b32.xlu0 %v1024, 96
        %v1030 = vpop.permute.xlu0 %1029
        %1033 = vrot.lane.b32.xlu0 %v652, 96
        %v1034 = vpop.permute.xlu0 %1033
        %1035 = vrot.lane.b32.xlu0 %v653, 96
        %v1036 = vpop.permute.xlu0 %1035
        %v1038 = vsel %vm771, %v1028, 0
        %v1041 = vsel %vm771, %v1030, 0
        %v1044 = vsel %vm771, %v1034, 0
        %v1047 = vsel %vm771, %v1036, 0
        %1049 = vmatprep.subr.bf16.mxu0 0
        %1050 = vmatpush1.bf16.xpose.msra.mxu0 %v1044
        %1051 = vmatprep.subr.bf16.mxu0 0
        %1052 = vmatpush1.bf16.xpose.msra.mxu0 %v1047
        %1053 = vmatprep.subr.bf16.mxu0 0
        %1054 = vmatpush1.bf16.xpose.msra.mxu0 0
        %1055 = vmatprep.subr.bf16.mxu0 0
        %1056 = vmatpush1.bf16.xpose.msra.mxu0 0
        %1057 = vmatprep.subr.bf16.mxu0 0
        %1058 = vmatpush1.bf16.xpose.msra.mxu0 0
        %1059 = vmatprep.subr.bf16.mxu0 0
        %1060 = vmatpush1.bf16.xpose.msra.mxu0 0
        %1061 = vmatprep.subr.bf16.mxu0 0
        %1062 = vmatpush1.bf16.xpose.msra.mxu0 0
        %1063 = vmatprep.subr.bf16.mxu0 0
        %1064 = vmatpush1.bf16.xpose.msra.mxu0 0
        %1065 = vmatprep.subr.bf16.mxu0 0
        %1066 = vmatpush1.bf16.xpose.msra.mxu0 0
        %1067 = vmatprep.subr.bf16.mxu0 0
        %1068 = vmatpush1.bf16.xpose.msra.mxu0 0
        %1069 = vmatprep.subr.bf16.mxu0 0
        %1070 = vmatpush1.bf16.xpose.msra.mxu0 0
        %1071 = vmatprep.subr.bf16.mxu0 0
        %1072 = vmatpush1.bf16.xpose.msra.mxu0 0
        %1073 = vmatprep.subr.bf16.mxu0 0
        %1074 = vmatpush1.bf16.xpose.msra.mxu0 0
        %1075 = vmatprep.subr.bf16.mxu0 0
        %1076 = vmatpush1.bf16.xpose.msra.mxu0 0
        %1077 = vmatprep.subr.bf16.mxu0 0
        %1078 = vmatpush1.bf16.xpose.msra.mxu0 0
        %1079 = vmatprep.subr.bf16.mxu0 0
        %1080 = vmatpush1.bf16.xpose.msra.mxu0 0
        %1081 = vmatprep.mubr.bf16.mxu0 0
        %1082 = vmatmul.mubr.bf16.gmra.mrb[0].mxu0 %v1038
        %v1083 = vpop.f32.mrb[0].mxu0
        %v1084 = vadd.f32 0.0, %v1083
        %v1085 = vpop.f32.mrb[0].mxu0
        %v1086 = vpop.f32.mrb[0].mxu0
        %v1087 = vadd.f32 0.0, %v1086
        %v1088 = vpop.f32.mrb[0].mxu0
        %1089 = vmatprep.mubr.bf16.mxu0 0
        %1090 = vmatmul.mubr.bf16.gmra.mrb[0].mxu0 %v1041
        %v1091 = vpop.f32.mrb[0].mxu0
        %v1092 = vadd.f32 0.0, %v1091
        %v1093 = vpop.f32.mrb[0].mxu0
        %v1094 = vpop.f32.mrb[0].mxu0
        %v1095 = vadd.f32 0.0, %v1094
        %v1096 = vpop.f32.mrb[0].mxu0
        %1097 = vdwg.mxu0
        %s1098 = scalar_lea.vmem [#allocation4], 32
        %v1099 = vld [vmem:[%s1098] sm:$0xff]
        %v1100 = vld [vmem:[%s1098 + $0x8] sm:$0xff]
        %v1101 = vld [vmem:[%s1098 + $0x10] sm:$0xff]
        %v1102 = vld [vmem:[%s1098 + $0x18] sm:$0xff]
        %v1103 = vsel %vm771, %v1084, -inf
        %1104 = vmax.xlane.f32.xlu0 %v1103
        %v1105 = vpop.xlane.xlu0 %1104
        %v1106 = vsel %vm771, %v1087, -inf
        %1107 = vmax.xlane.f32.xlu0 %v1106
        %v1108 = vpop.xlane.xlu0 %1107
        %v1109 = vsel %vm771, %v1092, -inf
        %1110 = vmax.xlane.f32.xlu0 %v1109
        %v1111 = vpop.xlane.xlu0 %1110
        %v1112 = vsel %vm771, %v1095, -inf
        %1113 = vmax.xlane.f32.xlu0 %v1112
        %v1114 = vpop.xlane.xlu0 %1113
        %v1115 = vmax.f32 %v1099, %v1105
        %v1116 = vmax.f32 %v1100, %v1108
        %v1117 = vmax.f32 %v1101, %v1111
        %v1118 = vmax.f32 %v1102, %v1114
        %v1119 = vsub.f32 %v1099, %v1115
        %v1120 = vsub.f32 %v1100, %v1116
        %v1121 = vsub.f32 %v1101, %v1117
        %v1122 = vsub.f32 %v1102, %v1118
        %v1123 = vmul.f32 %v1119, 1.442695
        %v1124 = vpow.pop %v1123
        %v1125 = vmul.f32 %v1120, 1.442695
        %v1126 = vpow.pop %v1125
        %v1127 = vmul.f32 %v1121, 1.442695
        %v1128 = vpow.pop %v1127
        %v1129 = vmul.f32 %v1122, 1.442695
        %v1130 = vpow.pop %v1129
        %1132 = vset.pattern.permute.xlu0 0
        %1133 = vperm.xlu0 %1132, %v1115
        %v1134 = vpop.permute.xlu0 %1133
        %1137 = vset.pattern.permute.xlu0 0
        %1138 = vperm.xlu0 %1137, %v1116
        %v1139 = vpop.permute.xlu0 %1138
        %1142 = vset.pattern.permute.xlu0 0
        %1143 = vperm.xlu0 %1142, %v1117
        %v1144 = vpop.permute.xlu0 %1143
        %1147 = vset.pattern.permute.xlu0 0
        %1148 = vperm.xlu0 %1147, %v1118
        %v1149 = vpop.permute.xlu0 %1148
        %v1151 = vsub.f32 %v1084, %v1134
        %v1152 = vsub.f32 %v1087, %v1139
        %v1153 = vsub.f32 %v1092, %v1144
        %v1154 = vsub.f32 %v1095, %v1149
        %v1155 = vmul.f32 %v1151, 1.442695
        %v1156 = vpow.pop %v1155
        %v1157 = vmul.f32 %v1152, 1.442695
        %v1158 = vpow.pop %v1157
        %v1159 = vmul.f32 %v1153, 1.442695
        %v1160 = vpow.pop %v1159
        %v1161 = vmul.f32 %v1154, 1.442695
        %v1162 = vpow.pop %v1161
        %s1163 = scalar_lea.vmem [#allocation5], 32
        %v1164 = vld [vmem:[%s1163] sm:$0xff]
        %v1165 = vld [vmem:[%s1163 + $0x8] sm:$0xff]
        %v1166 = vld [vmem:[%s1163 + $0x10] sm:$0xff]
        %v1167 = vld [vmem:[%s1163 + $0x18] sm:$0xff]
        %v1168 = vmul.f32 %v1124, %v1164
        %v1169 = vmul.f32 %v1126, %v1165
        %v1170 = vmul.f32 %v1128, %v1166
        %v1171 = vmul.f32 %v1130, %v1167
        %v1172 = vsel %vm771, %v1156, 0.0
        %1173 = vadd.xlane.f32.xlu0 %v1172
        %v1174 = vpop.xlane.xlu0 %1173
        %v1175 = vsel %vm771, %v1158, 0.0
        %1176 = vadd.xlane.f32.xlu0 %v1175
        %v1177 = vpop.xlane.xlu0 %1176
        %v1178 = vsel %vm771, %v1160, 0.0
        %1179 = vadd.xlane.f32.xlu0 %v1178
        %v1180 = vpop.xlane.xlu0 %1179
        %v1181 = vsel %vm771, %v1162, 0.0
        %1182 = vadd.xlane.f32.xlu0 %v1181
        %v1183 = vpop.xlane.xlu0 %1182
        %v1184 = vadd.f32 %v1168, %v1174
        %v1185 = vadd.f32 %v1169, %v1177
        %v1186 = vadd.f32 %v1170, %v1180
        %v1187 = vadd.f32 %v1171, %v1183
        %1188 = vst.msk [vmem:[%s1163] sm:$0xff] %vm921, %v1184
        %1189 = vst.msk [vmem:[%s1163 + $0x8] sm:$0xff] %vm921, %v1185
        %1190 = vst.msk [vmem:[%s1163 + $0x10] sm:$0xff] %vm921, %v1186
        %1191 = vst.msk [vmem:[%s1163 + $0x18] sm:$0xff] %vm921, %v1187
        %v1192 = vld [vmem:[#allocation3] sm:$0xff]
        %v1193 = vld [vmem:[#allocation3 + $0x8] sm:$0xff]
        %v1194 = vld [vmem:[#allocation3 + $0x10] sm:$0xff]
        %v1195 = vld [vmem:[#allocation3 + $0x18] sm:$0xff]
        %1197 = vset.pattern.permute.xlu0 0
        %1198 = vperm.xlu0 %1197, %v1124
        %v1199 = vpop.permute.xlu0 %1198
        %1202 = vset.pattern.permute.xlu0 0
        %1203 = vperm.xlu0 %1202, %v1126
        %v1204 = vpop.permute.xlu0 %1203
        %1207 = vset.pattern.permute.xlu0 0
        %1208 = vperm.xlu0 %1207, %v1128
        %v1209 = vpop.permute.xlu0 %1208
        %1212 = vset.pattern.permute.xlu0 0
        %1213 = vperm.xlu0 %1212, %v1130
        %v1214 = vpop.permute.xlu0 %1213
        %v1216 = vmul.f32 %v1199, %v1192
        %v1217 = vmul.f32 %v1204, %v1193
        %v1218 = vmul.f32 %v1209, %v1194
        %v1219 = vmul.f32 %v1214, %v1195
        %v1220 = vpack.c.bf16 %v1158, %v1156
        %v1221 = vpack.c.bf16 %v1162, %v1160
        %1224 = vrot.lane.b32.xlu0 %v767, 96
        %v1225 = vpop.permute.xlu0 %1224
        %1226 = vrot.lane.b32.xlu0 %v768, 96
        %v1227 = vpop.permute.xlu0 %1226
        %v1231 = vsel %vm771, %v1220, 0
        %v1234 = vsel %vm771, %v1221, 0
        %1236 = vmatprep.subr.bf16.mxu0 0
        %1237 = vmatpush1.bf16.msra.mxu0 %v1225
        %1238 = vmatprep.subr.bf16.mxu0 0
        %1239 = vmatpush1.bf16.msra.mxu0 %v1227
        %1240 = vmatprep.subr.bf16.mxu0 0
        %1241 = vmatpush1.bf16.msra.mxu0 0
        %1242 = vmatprep.subr.bf16.mxu0 0
        %1243 = vmatpush1.bf16.msra.mxu0 0
        %1244 = vmatprep.subr.bf16.mxu0 0
        %1245 = vmatpush1.bf16.msra.mxu0 0
        %1246 = vmatprep.subr.bf16.mxu0 0
        %1247 = vmatpush1.bf16.msra.mxu0 0
        %1248 = vmatprep.subr.bf16.mxu0 0
        %1249 = vmatpush1.bf16.msra.mxu0 0
        %1250 = vmatprep.subr.bf16.mxu0 0
        %1251 = vmatpush1.bf16.msra.mxu0 0
        %1252 = vmatprep.subr.bf16.mxu0 0
        %1253 = vmatpush1.bf16.msra.mxu0 0
        %1254 = vmatprep.subr.bf16.mxu0 0
        %1255 = vmatpush1.bf16.msra.mxu0 0
        %1256 = vmatprep.subr.bf16.mxu0 0
        %1257 = vmatpush1.bf16.msra.mxu0 0
        %1258 = vmatprep.subr.bf16.mxu0 0
        %1259 = vmatpush1.bf16.msra.mxu0 0
        %1260 = vmatprep.subr.bf16.mxu0 0
        %1261 = vmatpush1.bf16.msra.mxu0 0
        %1262 = vmatprep.subr.bf16.mxu0 0
        %1263 = vmatpush1.bf16.msra.mxu0 0
        %1264 = vmatprep.subr.bf16.mxu0 0
        %1265 = vmatpush1.bf16.msra.mxu0 0
        %1266 = vmatprep.subr.bf16.mxu0 0
        %1267 = vmatpush1.bf16.msra.mxu0 0
        %1268 = vmatprep.mubr.bf16.mxu0 0
        %1269 = vmatmul.mubr.bf16.gmra.mrb[0].mxu0 %v1231
        %v1270 = vpop.f32.mrb[0].mxu0
        %v1271 = vadd.f32 0.0, %v1270
        %v1272 = vpop.f32.mrb[0].mxu0
        %v1273 = vpop.f32.mrb[0].mxu0
        %v1274 = vadd.f32 0.0, %v1273
        %v1275 = vpop.f32.mrb[0].mxu0
        %1276 = vmatprep.mubr.bf16.mxu0 0
        %1277 = vmatmul.mubr.bf16.gmra.mrb[0].mxu0 %v1234
        %v1278 = vpop.f32.mrb[0].mxu0
        %v1279 = vadd.f32 0.0, %v1278
        %v1280 = vpop.f32.mrb[0].mxu0
        %v1281 = vpop.f32.mrb[0].mxu0
        %v1282 = vadd.f32 0.0, %v1281
        %v1283 = vpop.f32.mrb[0].mxu0
        %1284 = vdwg.mxu0
        %1289 = vrot.lane.b32.xlu0 %v1271, 32
        %v1290 = vpop.permute.xlu0 %1289
        %1291 = vrot.lane.b32.xlu0 %v1274, 32
        %v1292 = vpop.permute.xlu0 %1291
        %1293 = vrot.lane.b32.xlu0 %v1279, 32
        %v1294 = vpop.permute.xlu0 %1293
        %1295 = vrot.lane.b32.xlu0 %v1282, 32
        %v1296 = vpop.permute.xlu0 %1295
        %v1301 = vadd.f32 %v1216, %v1290
        %v1302 = vadd.f32 %v1217, %v1292
        %v1303 = vadd.f32 %v1218, %v1294
        %v1304 = vadd.f32 %v1219, %v1296
        %vm1305 = vcmask 523520
        %1306 = vst.msk [vmem:[#allocation3] sm:$0xff] %vm1305, %v1301
        %1307 = vst.msk [vmem:[#allocation3 + $0x8] sm:$0xff] %vm1305, %v1302
        %1308 = vst.msk [vmem:[#allocation3 + $0x10] sm:$0xff] %vm1305, %v1303
        %1309 = vst.msk [vmem:[#allocation3 + $0x18] sm:$0xff] %vm1305, %v1304
        %1310 = vst.msk [vmem:[%s1098] sm:$0xff] %vm921, %v1115
        %1311 = vst.msk [vmem:[%s1098 + $0x8] sm:$0xff] %vm921, %v1116
        %1312 = vst.msk [vmem:[%s1098 + $0x10] sm:$0xff] %vm921, %v1117
        %1313 = vst.msk [vmem:[%s1098 + $0x18] sm:$0xff] %vm921, %v1118
        %v1314 = vld [vmem:[#allocation2] sm:$0xff]
        %v1315 = vld [vmem:[#allocation2 + $0x8] sm:$0xff]
        %1318 = vrot.lane.b32.xlu0 %v1314, 64
        %v1319 = vpop.permute.xlu0 %1318
        %1320 = vrot.lane.b32.xlu0 %v1315, 64
        %v1321 = vpop.permute.xlu0 %1320
        %1322 = vrot.lane.b32.xlu0 %v652, 64
        %v1323 = vpop.permute.xlu0 %1322
        %1324 = vrot.lane.b32.xlu0 %v653, 64
        %v1325 = vpop.permute.xlu0 %1324
        %v1327 = vsel %vm771, %v1319, 0
        %v1330 = vsel %vm771, %v1321, 0
        %v1333 = vsel %vm771, %v1323, 0
        %v1336 = vsel %vm771, %v1325, 0
        %1338 = vmatprep.subr.bf16.mxu0 0
        %1339 = vmatpush1.bf16.xpose.msra.mxu0 %v1333
        %1340 = vmatprep.subr.bf16.mxu0 0
        %1341 = vmatpush1.bf16.xpose.msra.mxu0 %v1336
        %1342 = vmatprep.subr.bf16.mxu0 0
        %1343 = vmatpush1.bf16.xpose.msra.mxu0 0
        %1344 = vmatprep.subr.bf16.mxu0 0
        %1345 = vmatpush1.bf16.xpose.msra.mxu0 0
        %1346 = vmatprep.subr.bf16.mxu0 0
        %1347 = vmatpush1.bf16.xpose.msra.mxu0 0
        %1348 = vmatprep.subr.bf16.mxu0 0
        %1349 = vmatpush1.bf16.xpose.msra.mxu0 0
        %1350 = vmatprep.subr.bf16.mxu0 0
        %1351 = vmatpush1.bf16.xpose.msra.mxu0 0
        %1352 = vmatprep.subr.bf16.mxu0 0
        %1353 = vmatpush1.bf16.xpose.msra.mxu0 0
        %1354 = vmatprep.subr.bf16.mxu0 0
        %1355 = vmatpush1.bf16.xpose.msra.mxu0 0
        %1356 = vmatprep.subr.bf16.mxu0 0
        %1357 = vmatpush1.bf16.xpose.msra.mxu0 0
        %1358 = vmatprep.subr.bf16.mxu0 0
        %1359 = vmatpush1.bf16.xpose.msra.mxu0 0
        %1360 = vmatprep.subr.bf16.mxu0 0
        %1361 = vmatpush1.bf16.xpose.msra.mxu0 0
        %1362 = vmatprep.subr.bf16.mxu0 0
        %1363 = vmatpush1.bf16.xpose.msra.mxu0 0
        %1364 = vmatprep.subr.bf16.mxu0 0
        %1365 = vmatpush1.bf16.xpose.msra.mxu0 0
        %1366 = vmatprep.subr.bf16.mxu0 0
        %1367 = vmatpush1.bf16.xpose.msra.mxu0 0
        %1368 = vmatprep.subr.bf16.mxu0 0
        %1369 = vmatpush1.bf16.xpose.msra.mxu0 0
        %1370 = vmatprep.mubr.bf16.mxu0 0
        %1371 = vmatmul.mubr.bf16.gmra.mrb[0].mxu0 %v1327
        %v1372 = vpop.f32.mrb[0].mxu0
        %v1373 = vadd.f32 0.0, %v1372
        %v1374 = vpop.f32.mrb[0].mxu0
        %v1375 = vpop.f32.mrb[0].mxu0
        %v1376 = vadd.f32 0.0, %v1375
        %v1377 = vpop.f32.mrb[0].mxu0
        %1378 = vmatprep.mubr.bf16.mxu0 0
        %1379 = vmatmul.mubr.bf16.gmra.mrb[0].mxu0 %v1330
        %v1380 = vpop.f32.mrb[0].mxu0
        %v1381 = vadd.f32 0.0, %v1380
        %v1382 = vpop.f32.mrb[0].mxu0
        %v1383 = vpop.f32.mrb[0].mxu0
        %v1384 = vadd.f32 0.0, %v1383
        %v1385 = vpop.f32.mrb[0].mxu0
        %1386 = vdwg.mxu0
        %s1387 = scalar_lea.vmem [#allocation4], 64
        %v1388 = vld [vmem:[%s1387] sm:$0xff]
        %v1389 = vld [vmem:[%s1387 + $0x8] sm:$0xff]
        %v1390 = vld [vmem:[%s1387 + $0x10] sm:$0xff]
        %v1391 = vld [vmem:[%s1387 + $0x18] sm:$0xff]
        %v1392 = vsel %vm771, %v1373, -inf
        %1393 = vmax.xlane.f32.xlu0 %v1392
        %v1394 = vpop.xlane.xlu0 %1393
        %v1395 = vsel %vm771, %v1376, -inf
        %1396 = vmax.xlane.f32.xlu0 %v1395
        %v1397 = vpop.xlane.xlu0 %1396
        %v1398 = vsel %vm771, %v1381, -inf
        %1399 = vmax.xlane.f32.xlu0 %v1398
        %v1400 = vpop.xlane.xlu0 %1399
        %v1401 = vsel %vm771, %v1384, -inf
        %1402 = vmax.xlane.f32.xlu0 %v1401
        %v1403 = vpop.xlane.xlu0 %1402
        %v1404 = vmax.f32 %v1388, %v1394
        %v1405 = vmax.f32 %v1389, %v1397
        %v1406 = vmax.f32 %v1390, %v1400
        %v1407 = vmax.f32 %v1391, %v1403
        %v1408 = vsub.f32 %v1388, %v1404
        %v1409 = vsub.f32 %v1389, %v1405
        %v1410 = vsub.f32 %v1390, %v1406
        %v1411 = vsub.f32 %v1391, %v1407
        %v1412 = vmul.f32 %v1408, 1.442695
        %v1413 = vpow.pop %v1412
        %v1414 = vmul.f32 %v1409, 1.442695
        %v1415 = vpow.pop %v1414
        %v1416 = vmul.f32 %v1410, 1.442695
        %v1417 = vpow.pop %v1416
        %v1418 = vmul.f32 %v1411, 1.442695
        %v1419 = vpow.pop %v1418
        %1421 = vset.pattern.permute.xlu0 0
        %1422 = vperm.xlu0 %1421, %v1404
        %v1423 = vpop.permute.xlu0 %1422
        %1426 = vset.pattern.permute.xlu0 0
        %1427 = vperm.xlu0 %1426, %v1405
        %v1428 = vpop.permute.xlu0 %1427
        %1431 = vset.pattern.permute.xlu0 0
        %1432 = vperm.xlu0 %1431, %v1406
        %v1433 = vpop.permute.xlu0 %1432
        %1436 = vset.pattern.permute.xlu0 0
        %1437 = vperm.xlu0 %1436, %v1407
        %v1438 = vpop.permute.xlu0 %1437
        %v1440 = vsub.f32 %v1373, %v1423
        %v1441 = vsub.f32 %v1376, %v1428
        %v1442 = vsub.f32 %v1381, %v1433
        %v1443 = vsub.f32 %v1384, %v1438
        %v1444 = vmul.f32 %v1440, 1.442695
        %v1445 = vpow.pop %v1444
        %v1446 = vmul.f32 %v1441, 1.442695
        %v1447 = vpow.pop %v1446
        %v1448 = vmul.f32 %v1442, 1.442695
        %v1449 = vpow.pop %v1448
        %v1450 = vmul.f32 %v1443, 1.442695
        %v1451 = vpow.pop %v1450
        %s1452 = scalar_lea.vmem [#allocation5], 64
        %v1453 = vld [vmem:[%s1452] sm:$0xff]
        %v1454 = vld [vmem:[%s1452 + $0x8] sm:$0xff]
        %v1455 = vld [vmem:[%s1452 + $0x10] sm:$0xff]
        %v1456 = vld [vmem:[%s1452 + $0x18] sm:$0xff]
        %v1457 = vmul.f32 %v1413, %v1453
        %v1458 = vmul.f32 %v1415, %v1454
        %v1459 = vmul.f32 %v1417, %v1455
        %v1460 = vmul.f32 %v1419, %v1456
        %v1461 = vsel %vm771, %v1445, 0.0
        %1462 = vadd.xlane.f32.xlu0 %v1461
        %v1463 = vpop.xlane.xlu0 %1462
        %v1464 = vsel %vm771, %v1447, 0.0
        %1465 = vadd.xlane.f32.xlu0 %v1464
        %v1466 = vpop.xlane.xlu0 %1465
        %v1467 = vsel %vm771, %v1449, 0.0
        %1468 = vadd.xlane.f32.xlu0 %v1467
        %v1469 = vpop.xlane.xlu0 %1468
        %v1470 = vsel %vm771, %v1451, 0.0
        %1471 = vadd.xlane.f32.xlu0 %v1470
        %v1472 = vpop.xlane.xlu0 %1471
        %v1473 = vadd.f32 %v1457, %v1463
        %v1474 = vadd.f32 %v1458, %v1466
        %v1475 = vadd.f32 %v1459, %v1469
        %v1476 = vadd.f32 %v1460, %v1472
        %1477 = vst.msk [vmem:[%s1452] sm:$0xff] %vm921, %v1473
        %1478 = vst.msk [vmem:[%s1452 + $0x8] sm:$0xff] %vm921, %v1474
        %1479 = vst.msk [vmem:[%s1452 + $0x10] sm:$0xff] %vm921, %v1475
        %1480 = vst.msk [vmem:[%s1452 + $0x18] sm:$0xff] %vm921, %v1476
        %v1481 = vld [vmem:[#allocation3] sm:$0xff]
        %v1482 = vld [vmem:[#allocation3 + $0x8] sm:$0xff]
        %v1483 = vld [vmem:[#allocation3 + $0x10] sm:$0xff]
        %v1484 = vld [vmem:[#allocation3 + $0x18] sm:$0xff]
        %1486 = vset.pattern.permute.xlu0 0
        %1487 = vperm.xlu0 %1486, %v1413
        %v1488 = vpop.permute.xlu0 %1487
        %1491 = vset.pattern.permute.xlu0 0
        %1492 = vperm.xlu0 %1491, %v1415
        %v1493 = vpop.permute.xlu0 %1492
        %1496 = vset.pattern.permute.xlu0 0
        %1497 = vperm.xlu0 %1496, %v1417
        %v1498 = vpop.permute.xlu0 %1497
        %1501 = vset.pattern.permute.xlu0 0
        %1502 = vperm.xlu0 %1501, %v1419
        %v1503 = vpop.permute.xlu0 %1502
        %v1505 = vmul.f32 %v1488, %v1481
        %v1506 = vmul.f32 %v1493, %v1482
        %v1507 = vmul.f32 %v1498, %v1483
        %v1508 = vmul.f32 %v1503, %v1484
        %v1509 = vpack.c.bf16 %v1447, %v1445
        %v1510 = vpack.c.bf16 %v1451, %v1449
        %1511 = vrot.lane.b32.xlu0 %v767, 64
        %v1512 = vpop.permute.xlu0 %1511
        %1513 = vrot.lane.b32.xlu0 %v768, 64
        %v1514 = vpop.permute.xlu0 %1513
        %v1518 = vsel %vm771, %v1509, 0
        %v1521 = vsel %vm771, %v1510, 0
        %1523 = vmatprep.subr.bf16.mxu0 0
        %1524 = vmatpush1.bf16.msra.mxu0 %v1512
        %1525 = vmatprep.subr.bf16.mxu0 0
        %1526 = vmatpush1.bf16.msra.mxu0 %v1514
        %1527 = vmatprep.subr.bf16.mxu0 0
        %1528 = vmatpush1.bf16.msra.mxu0 0
        %1529 = vmatprep.subr.bf16.mxu0 0
        %1530 = vmatpush1.bf16.msra.mxu0 0
        %1531 = vmatprep.subr.bf16.mxu0 0
        %1532 = vmatpush1.bf16.msra.mxu0 0
        %1533 = vmatprep.subr.bf16.mxu0 0
        %1534 = vmatpush1.bf16.msra.mxu0 0
        %1535 = vmatprep.subr.bf16.mxu0 0
        %1536 = vmatpush1.bf16.msra.mxu0 0
        %1537 = vmatprep.subr.bf16.mxu0 0
        %1538 = vmatpush1.bf16.msra.mxu0 0
        %1539 = vmatprep.subr.bf16.mxu0 0
        %1540 = vmatpush1.bf16.msra.mxu0 0
        %1541 = vmatprep.subr.bf16.mxu0 0
        %1542 = vmatpush1.bf16.msra.mxu0 0
        %1543 = vmatprep.subr.bf16.mxu0 0
        %1544 = vmatpush1.bf16.msra.mxu0 0
        %1545 = vmatprep.subr.bf16.mxu0 0
        %1546 = vmatpush1.bf16.msra.mxu0 0
        %1547 = vmatprep.subr.bf16.mxu0 0
        %1548 = vmatpush1.bf16.msra.mxu0 0
        %1549 = vmatprep.subr.bf16.mxu0 0
        %1550 = vmatpush1.bf16.msra.mxu0 0
        %1551 = vmatprep.subr.bf16.mxu0 0
        %1552 = vmatpush1.bf16.msra.mxu0 0
        %1553 = vmatprep.subr.bf16.mxu0 0
        %1554 = vmatpush1.bf16.msra.mxu0 0
        %1555 = vmatprep.mubr.bf16.mxu0 0
        %1556 = vmatmul.mubr.bf16.gmra.mrb[0].mxu0 %v1518
        %v1557 = vpop.f32.mrb[0].mxu0
        %v1558 = vadd.f32 0.0, %v1557
        %v1559 = vpop.f32.mrb[0].mxu0
        %v1560 = vpop.f32.mrb[0].mxu0
        %v1561 = vadd.f32 0.0, %v1560
        %v1562 = vpop.f32.mrb[0].mxu0
        %1563 = vmatprep.mubr.bf16.mxu0 0
        %1564 = vmatmul.mubr.bf16.gmra.mrb[0].mxu0 %v1521
        %v1565 = vpop.f32.mrb[0].mxu0
        %v1566 = vadd.f32 0.0, %v1565
        %v1567 = vpop.f32.mrb[0].mxu0
        %v1568 = vpop.f32.mrb[0].mxu0
        %v1569 = vadd.f32 0.0, %v1568
        %v1570 = vpop.f32.mrb[0].mxu0
        %1571 = vdwg.mxu0
        %1576 = vrot.lane.b32.xlu0 %v1558, 64
        %v1577 = vpop.permute.xlu0 %1576
        %1578 = vrot.lane.b32.xlu0 %v1561, 64
        %v1579 = vpop.permute.xlu0 %1578
        %1580 = vrot.lane.b32.xlu0 %v1566, 64
        %v1581 = vpop.permute.xlu0 %1580
        %1582 = vrot.lane.b32.xlu0 %v1569, 64
        %v1583 = vpop.permute.xlu0 %1582
        %v1588 = vadd.f32 %v1505, %v1577
        %v1589 = vadd.f32 %v1506, %v1579
        %v1590 = vadd.f32 %v1507, %v1581
        %v1591 = vadd.f32 %v1508, %v1583
        %vm1592 = vcmask 785920
        %1593 = vst.msk [vmem:[#allocation3] sm:$0xff] %vm1592, %v1588
        %1594 = vst.msk [vmem:[#allocation3 + $0x8] sm:$0xff] %vm1592, %v1589
        %1595 = vst.msk [vmem:[#allocation3 + $0x10] sm:$0xff] %vm1592, %v1590
        %1596 = vst.msk [vmem:[#allocation3 + $0x18] sm:$0xff] %vm1592, %v1591
        %1597 = vst.msk [vmem:[%s1387] sm:$0xff] %vm921, %v1404
        %1598 = vst.msk [vmem:[%s1387 + $0x8] sm:$0xff] %vm921, %v1405
        %1599 = vst.msk [vmem:[%s1387 + $0x10] sm:$0xff] %vm921, %v1406
        %1600 = vst.msk [vmem:[%s1387 + $0x18] sm:$0xff] %vm921, %v1407
        %v1601 = vld [vmem:[#allocation2] sm:$0xff]
        %v1602 = vld [vmem:[#allocation2 + $0x8] sm:$0xff]
        %1605 = vrot.lane.b32.xlu0 %v1601, 32
        %v1606 = vpop.permute.xlu0 %1605
        %1607 = vrot.lane.b32.xlu0 %v1602, 32
        %v1608 = vpop.permute.xlu0 %1607
        %1609 = vrot.lane.b32.xlu0 %v652, 32
        %v1610 = vpop.permute.xlu0 %1609
        %1611 = vrot.lane.b32.xlu0 %v653, 32
        %v1612 = vpop.permute.xlu0 %1611
        %v1614 = vsel %vm771, %v1606, 0
        %v1617 = vsel %vm771, %v1608, 0
        %v1620 = vsel %vm771, %v1610, 0
        %v1623 = vsel %vm771, %v1612, 0
        %1625 = vmatprep.subr.bf16.mxu0 0
        %1626 = vmatpush1.bf16.xpose.msra.mxu0 %v1620
        %1627 = vmatprep.subr.bf16.mxu0 0
        %1628 = vmatpush1.bf16.xpose.msra.mxu0 %v1623
        %1629 = vmatprep.subr.bf16.mxu0 0
        %1630 = vmatpush1.bf16.xpose.msra.mxu0 0
        %1631 = vmatprep.subr.bf16.mxu0 0
        %1632 = vmatpush1.bf16.xpose.msra.mxu0 0
        %1633 = vmatprep.subr.bf16.mxu0 0
        %1634 = vmatpush1.bf16.xpose.msra.mxu0 0
        %1635 = vmatprep.subr.bf16.mxu0 0
        %1636 = vmatpush1.bf16.xpose.msra.mxu0 0
        %1637 = vmatprep.subr.bf16.mxu0 0
        %1638 = vmatpush1.bf16.xpose.msra.mxu0 0
        %1639 = vmatprep.subr.bf16.mxu0 0
        %1640 = vmatpush1.bf16.xpose.msra.mxu0 0
        %1641 = vmatprep.subr.bf16.mxu0 0
        %1642 = vmatpush1.bf16.xpose.msra.mxu0 0
        %1643 = vmatprep.subr.bf16.mxu0 0
        %1644 = vmatpush1.bf16.xpose.msra.mxu0 0
        %1645 = vmatprep.subr.bf16.mxu0 0
        %1646 = vmatpush1.bf16.xpose.msra.mxu0 0
        %1647 = vmatprep.subr.bf16.mxu0 0
        %1648 = vmatpush1.bf16.xpose.msra.mxu0 0
        %1649 = vmatprep.subr.bf16.mxu0 0
        %1650 = vmatpush1.bf16.xpose.msra.mxu0 0
        %1651 = vmatprep.subr.bf16.mxu0 0
        %1652 = vmatpush1.bf16.xpose.msra.mxu0 0
        %1653 = vmatprep.subr.bf16.mxu0 0
        %1654 = vmatpush1.bf16.xpose.msra.mxu0 0
        %1655 = vmatprep.subr.bf16.mxu0 0
        %1656 = vmatpush1.bf16.xpose.msra.mxu0 0
        %1657 = vmatprep.mubr.bf16.mxu0 0
        %1658 = vmatmul.mubr.bf16.gmra.mrb[0].mxu0 %v1614
        %v1659 = vpop.f32.mrb[0].mxu0
        %v1660 = vadd.f32 0.0, %v1659
        %v1661 = vpop.f32.mrb[0].mxu0
        %v1662 = vpop.f32.mrb[0].mxu0
        %v1663 = vadd.f32 0.0, %v1662
        %v1664 = vpop.f32.mrb[0].mxu0
        %1665 = vmatprep.mubr.bf16.mxu0 0
        %1666 = vmatmul.mubr.bf16.gmra.mrb[0].mxu0 %v1617
        %v1667 = vpop.f32.mrb[0].mxu0
        %v1668 = vadd.f32 0.0, %v1667
        %v1669 = vpop.f32.mrb[0].mxu0
        %v1670 = vpop.f32.mrb[0].mxu0
        %v1671 = vadd.f32 0.0, %v1670
        %v1672 = vpop.f32.mrb[0].mxu0
        %1673 = vdwg.mxu0
        %s1674 = scalar_lea.vmem [#allocation4], 96
        %v1675 = vld [vmem:[%s1674] sm:$0xff]
        %v1676 = vld [vmem:[%s1674 + $0x8] sm:$0xff]
        %v1677 = vld [vmem:[%s1674 + $0x10] sm:$0xff]
        %v1678 = vld [vmem:[%s1674 + $0x18] sm:$0xff]
        %v1679 = vsel %vm771, %v1660, -inf
        %1680 = vmax.xlane.f32.xlu0 %v1679
        %v1681 = vpop.xlane.xlu0 %1680
        %v1682 = vsel %vm771, %v1663, -inf
        %1683 = vmax.xlane.f32.xlu0 %v1682
        %v1684 = vpop.xlane.xlu0 %1683
        %v1685 = vsel %vm771, %v1668, -inf
        %1686 = vmax.xlane.f32.xlu0 %v1685
        %v1687 = vpop.xlane.xlu0 %1686
        %v1688 = vsel %vm771, %v1671, -inf
        %1689 = vmax.xlane.f32.xlu0 %v1688
        %v1690 = vpop.xlane.xlu0 %1689
        %v1691 = vmax.f32 %v1675, %v1681
        %v1692 = vmax.f32 %v1676, %v1684
        %v1693 = vmax.f32 %v1677, %v1687
        %v1694 = vmax.f32 %v1678, %v1690
        %v1695 = vsub.f32 %v1675, %v1691
        %v1696 = vsub.f32 %v1676, %v1692
        %v1697 = vsub.f32 %v1677, %v1693
        %v1698 = vsub.f32 %v1678, %v1694
        %v1699 = vmul.f32 %v1695, 1.442695
        %v1700 = vpow.pop %v1699
        %v1701 = vmul.f32 %v1696, 1.442695
        %v1702 = vpow.pop %v1701
        %v1703 = vmul.f32 %v1697, 1.442695
        %v1704 = vpow.pop %v1703
        %v1705 = vmul.f32 %v1698, 1.442695
        %v1706 = vpow.pop %v1705
        %1708 = vset.pattern.permute.xlu0 0
        %1709 = vperm.xlu0 %1708, %v1691
        %v1710 = vpop.permute.xlu0 %1709
        %1713 = vset.pattern.permute.xlu0 0
        %1714 = vperm.xlu0 %1713, %v1692
        %v1715 = vpop.permute.xlu0 %1714
        %1718 = vset.pattern.permute.xlu0 0
        %1719 = vperm.xlu0 %1718, %v1693
        %v1720 = vpop.permute.xlu0 %1719
        %1723 = vset.pattern.permute.xlu0 0
        %1724 = vperm.xlu0 %1723, %v1694
        %v1725 = vpop.permute.xlu0 %1724
        %v1727 = vsub.f32 %v1660, %v1710
        %v1728 = vsub.f32 %v1663, %v1715
        %v1729 = vsub.f32 %v1668, %v1720
        %v1730 = vsub.f32 %v1671, %v1725
        %v1731 = vmul.f32 %v1727, 1.442695
        %v1732 = vpow.pop %v1731
        %v1733 = vmul.f32 %v1728, 1.442695
        %v1734 = vpow.pop %v1733
        %v1735 = vmul.f32 %v1729, 1.442695
        %v1736 = vpow.pop %v1735
        %v1737 = vmul.f32 %v1730, 1.442695
        %v1738 = vpow.pop %v1737
        %s1739 = scalar_lea.vmem [#allocation5], 96
        %v1740 = vld [vmem:[%s1739] sm:$0xff]
        %v1741 = vld [vmem:[%s1739 + $0x8] sm:$0xff]
        %v1742 = vld [vmem:[%s1739 + $0x10] sm:$0xff]
        %v1743 = vld [vmem:[%s1739 + $0x18] sm:$0xff]
        %v1744 = vmul.f32 %v1700, %v1740
        %v1745 = vmul.f32 %v1702, %v1741
        %v1746 = vmul.f32 %v1704, %v1742
        %v1747 = vmul.f32 %v1706, %v1743
        %v1748 = vsel %vm771, %v1732, 0.0
        %1749 = vadd.xlane.f32.xlu0 %v1748
        %v1750 = vpop.xlane.xlu0 %1749
        %v1751 = vsel %vm771, %v1734, 0.0
        %1752 = vadd.xlane.f32.xlu0 %v1751
        %v1753 = vpop.xlane.xlu0 %1752
        %v1754 = vsel %vm771, %v1736, 0.0
        %1755 = vadd.xlane.f32.xlu0 %v1754
        %v1756 = vpop.xlane.xlu0 %1755
        %v1757 = vsel %vm771, %v1738, 0.0
        %1758 = vadd.xlane.f32.xlu0 %v1757
        %v1759 = vpop.xlane.xlu0 %1758
        %v1760 = vadd.f32 %v1744, %v1750
        %v1761 = vadd.f32 %v1745, %v1753
        %v1762 = vadd.f32 %v1746, %v1756
        %v1763 = vadd.f32 %v1747, %v1759
        %1764 = vst.msk [vmem:[%s1739] sm:$0xff] %vm921, %v1760
        %1765 = vst.msk [vmem:[%s1739 + $0x8] sm:$0xff] %vm921, %v1761
        %1766 = vst.msk [vmem:[%s1739 + $0x10] sm:$0xff] %vm921, %v1762
        %1767 = vst.msk [vmem:[%s1739 + $0x18] sm:$0xff] %vm921, %v1763
        %v1768 = vld [vmem:[#allocation3] sm:$0xff]
        %v1769 = vld [vmem:[#allocation3 + $0x8] sm:$0xff]
        %v1770 = vld [vmem:[#allocation3 + $0x10] sm:$0xff]
        %v1771 = vld [vmem:[#allocation3 + $0x18] sm:$0xff]
        %1773 = vset.pattern.permute.xlu0 0
        %1774 = vperm.xlu0 %1773, %v1700
        %v1775 = vpop.permute.xlu0 %1774
        %1778 = vset.pattern.permute.xlu0 0
        %1779 = vperm.xlu0 %1778, %v1702
        %v1780 = vpop.permute.xlu0 %1779
        %1783 = vset.pattern.permute.xlu0 0
        %1784 = vperm.xlu0 %1783, %v1704
        %v1785 = vpop.permute.xlu0 %1784
        %1788 = vset.pattern.permute.xlu0 0
        %1789 = vperm.xlu0 %1788, %v1706
        %v1790 = vpop.permute.xlu0 %1789
        %v1792 = vmul.f32 %v1775, %v1768
        %v1793 = vmul.f32 %v1780, %v1769
        %v1794 = vmul.f32 %v1785, %v1770
        %v1795 = vmul.f32 %v1790, %v1771
        %v1796 = vpack.c.bf16 %v1734, %v1732
        %v1797 = vpack.c.bf16 %v1738, %v1736
        %1798 = vrot.lane.b32.xlu0 %v767, 32
        %v1799 = vpop.permute.xlu0 %1798
        %1800 = vrot.lane.b32.xlu0 %v768, 32
        %v1801 = vpop.permute.xlu0 %1800
        %v1805 = vsel %vm771, %v1796, 0
        %v1808 = vsel %vm771, %v1797, 0
        %1810 = vmatprep.subr.bf16.mxu0 0
        %1811 = vmatpush1.bf16.msra.mxu0 %v1799
        %1812 = vmatprep.subr.bf16.mxu0 0
        %1813 = vmatpush1.bf16.msra.mxu0 %v1801
        %1814 = vmatprep.subr.bf16.mxu0 0
        %1815 = vmatpush1.bf16.msra.mxu0 0
        %1816 = vmatprep.subr.bf16.mxu0 0
        %1817 = vmatpush1.bf16.msra.mxu0 0
        %1818 = vmatprep.subr.bf16.mxu0 0
        %1819 = vmatpush1.bf16.msra.mxu0 0
        %1820 = vmatprep.subr.bf16.mxu0 0
        %1821 = vmatpush1.bf16.msra.mxu0 0
        %1822 = vmatprep.subr.bf16.mxu0 0
        %1823 = vmatpush1.bf16.msra.mxu0 0
        %1824 = vmatprep.subr.bf16.mxu0 0
        %1825 = vmatpush1.bf16.msra.mxu0 0
        %1826 = vmatprep.subr.bf16.mxu0 0
        %1827 = vmatpush1.bf16.msra.mxu0 0
        %1828 = vmatprep.subr.bf16.mxu0 0
        %1829 = vmatpush1.bf16.msra.mxu0 0
        %1830 = vmatprep.subr.bf16.mxu0 0
        %1831 = vmatpush1.bf16.msra.mxu0 0
        %1832 = vmatprep.subr.bf16.mxu0 0
        %1833 = vmatpush1.bf16.msra.mxu0 0
        %1834 = vmatprep.subr.bf16.mxu0 0
        %1835 = vmatpush1.bf16.msra.mxu0 0
        %1836 = vmatprep.subr.bf16.mxu0 0
        %1837 = vmatpush1.bf16.msra.mxu0 0
        %1838 = vmatprep.subr.bf16.mxu0 0
        %1839 = vmatpush1.bf16.msra.mxu0 0
        %1840 = vmatprep.subr.bf16.mxu0 0
        %1841 = vmatpush1.bf16.msra.mxu0 0
        %1842 = vmatprep.mubr.bf16.mxu0 0
        %1843 = vmatmul.mubr.bf16.gmra.mrb[0].mxu0 %v1805
        %v1844 = vpop.f32.mrb[0].mxu0
        %v1845 = vadd.f32 0.0, %v1844
        %v1846 = vpop.f32.mrb[0].mxu0
        %v1847 = vpop.f32.mrb[0].mxu0
        %v1848 = vadd.f32 0.0, %v1847
        %v1849 = vpop.f32.mrb[0].mxu0
        %1850 = vmatprep.mubr.bf16.mxu0 0
        %1851 = vmatmul.mubr.bf16.gmra.mrb[0].mxu0 %v1808
        %v1852 = vpop.f32.mrb[0].mxu0
        %v1853 = vadd.f32 0.0, %v1852
        %v1854 = vpop.f32.mrb[0].mxu0
        %v1855 = vpop.f32.mrb[0].mxu0
        %v1856 = vadd.f32 0.0, %v1855
        %v1857 = vpop.f32.mrb[0].mxu0
        %1858 = vdwg.mxu0
        %1863 = vrot.lane.b32.xlu0 %v1845, 96
        %v1864 = vpop.permute.xlu0 %1863
        %1865 = vrot.lane.b32.xlu0 %v1848, 96
        %v1866 = vpop.permute.xlu0 %1865
        %1867 = vrot.lane.b32.xlu0 %v1853, 96
        %v1868 = vpop.permute.xlu0 %1867
        %1869 = vrot.lane.b32.xlu0 %v1856, 96
        %v1870 = vpop.permute.xlu0 %1869
        %v1875 = vadd.f32 %v1792, %v1864
        %v1876 = vadd.f32 %v1793, %v1866
        %v1877 = vadd.f32 %v1794, %v1868
        %v1878 = vadd.f32 %v1795, %v1870
        %vm1879 = vcmask 1048320
        %1880 = vst.msk [vmem:[#allocation3] sm:$0xff] %vm1879, %v1875
        %1881 = vst.msk [vmem:[#allocation3 + $0x8] sm:$0xff] %vm1879, %v1876
        %1882 = vst.msk [vmem:[#allocation3 + $0x10] sm:$0xff] %vm1879, %v1877
        %1883 = vst.msk [vmem:[#allocation3 + $0x18] sm:$0xff] %vm1879, %v1878
        %1884 = vst.msk [vmem:[%s1674] sm:$0xff] %vm921, %v1691
        %1885 = vst.msk [vmem:[%s1674 + $0x8] sm:$0xff] %vm921, %v1692
        %1886 = vst.msk [vmem:[%s1674 + $0x10] sm:$0xff] %vm921, %v1693
        %1887 = vst.msk [vmem:[%s1674 + $0x18] sm:$0xff] %vm921, %v1694
        %p1888 = scmp.eq.s32.totalorder %s33, 1
        // Predicated region
        $region61: #{tpu_custom_call.1} parent=39 // pred_check
          %p1889 = pneg %p1888
        $region62: #{tpu_custom_call.1} parent=39 // pred_check_branch
          %1891 = sbr.rel (%p1889) target = $region64
        $region63: #{tpu_custom_call.1} parent=39 // pred_region
          %v1892 = vld [vmem:[#allocation5] sm:$0xff]
          %v1893 = vld [vmem:[#allocation5 + $0x8] sm:$0xff]
          %v1894 = vld [vmem:[#allocation5 + $0x10] sm:$0xff]
          %v1895 = vld [vmem:[#allocation5 + $0x18] sm:$0xff]
          %v1896 = vrcp.pop %v1892
          %v1897 = vrcp.pop %v1893
          %v1898 = vrcp.pop %v1894
          %v1899 = vrcp.pop %v1895
          %v1900 = vld [vmem:[#allocation3] sm:$0xff]
          %v1901 = vld [vmem:[#allocation3 + $0x8] sm:$0xff]
          %v1902 = vld [vmem:[#allocation3 + $0x10] sm:$0xff]
          %v1903 = vld [vmem:[#allocation3 + $0x18] sm:$0xff]
          %1905 = vset.pattern.permute.xlu0 0
          %1906 = vperm.xlu0 %1905, %v1896
          %v1907 = vpop.permute.xlu0 %1906
          %1910 = vset.pattern.permute.xlu0 0
          %1911 = vperm.xlu0 %1910, %v1897
          %v1912 = vpop.permute.xlu0 %1911
          %1915 = vset.pattern.permute.xlu0 0
          %1916 = vperm.xlu0 %1915, %v1898
          %v1917 = vpop.permute.xlu0 %1916
          %1920 = vset.pattern.permute.xlu0 0
          %1921 = vperm.xlu0 %1920, %v1899
          %v1922 = vpop.permute.xlu0 %1921
          %v1924 = vmul.f32 %v1900, %v1907
          %v1925 = vmul.f32 %v1901, %v1912
          %v1926 = vmul.f32 %v1902, %v1917
          %v1927 = vmul.f32 %v1903, %v1922
          %1928 = vst.msk [vmem:[#allocation3] sm:$0xff] %vm771, %v1924
          %1929 = vst.msk [vmem:[#allocation3 + $0x8] sm:$0xff] %vm771, %v1925
          %1930 = vst.msk [vmem:[#allocation3 + $0x10] sm:$0xff] %vm771, %v1926
          %1931 = vst.msk [vmem:[#allocation3 + $0x18] sm:$0xff] %vm771, %v1927
          %v1932 = vld [vmem:[%s1163] sm:$0xff]
          %v1933 = vld [vmem:[%s1163 + $0x8] sm:$0xff]
          %v1934 = vld [vmem:[%s1163 + $0x10] sm:$0xff]
          %v1935 = vld [vmem:[%s1163 + $0x18] sm:$0xff]
          %v1936 = vrcp.pop %v1932
          %v1937 = vrcp.pop %v1933
          %v1938 = vrcp.pop %v1934
          %v1939 = vrcp.pop %v1935
          %v1940 = vld [vmem:[#allocation3] sm:$0xff]
          %v1941 = vld [vmem:[#allocation3 + $0x8] sm:$0xff]
          %v1942 = vld [vmem:[#allocation3 + $0x10] sm:$0xff]
          %v1943 = vld [vmem:[#allocation3 + $0x18] sm:$0xff]
          %1945 = vset.pattern.permute.xlu0 0
          %1946 = vperm.xlu0 %1945, %v1936
          %v1947 = vpop.permute.xlu0 %1946
          %1950 = vset.pattern.permute.xlu0 0
          %1951 = vperm.xlu0 %1950, %v1937
          %v1952 = vpop.permute.xlu0 %1951
          %1955 = vset.pattern.permute.xlu0 0
          %1956 = vperm.xlu0 %1955, %v1938
          %v1957 = vpop.permute.xlu0 %1956
          %1960 = vset.pattern.permute.xlu0 0
          %1961 = vperm.xlu0 %1960, %v1939
          %v1962 = vpop.permute.xlu0 %1961
          %v1964 = vmul.f32 %v1940, %v1947
          %v1965 = vmul.f32 %v1941, %v1952
          %v1966 = vmul.f32 %v1942, %v1957
          %v1967 = vmul.f32 %v1943, %v1962
          %1968 = vst.msk [vmem:[#allocation3] sm:$0xff] %vm1305, %v1964
          %1969 = vst.msk [vmem:[#allocation3 + $0x8] sm:$0xff] %vm1305, %v1965
          %1970 = vst.msk [vmem:[#allocation3 + $0x10] sm:$0xff] %vm1305, %v1966
          %1971 = vst.msk [vmem:[#allocation3 + $0x18] sm:$0xff] %vm1305, %v1967
          %v1972 = vld [vmem:[%s1452] sm:$0xff]
          %v1973 = vld [vmem:[%s1452 + $0x8] sm:$0xff]
          %v1974 = vld [vmem:[%s1452 + $0x10] sm:$0xff]
          %v1975 = vld [vmem:[%s1452 + $0x18] sm:$0xff]
          %v1976 = vrcp.pop %v1972
          %v1977 = vrcp.pop %v1973
          %v1978 = vrcp.pop %v1974
          %v1979 = vrcp.pop %v1975
          %v1980 = vld [vmem:[#allocation3] sm:$0xff]
          %v1981 = vld [vmem:[#allocation3 + $0x8] sm:$0xff]
          %v1982 = vld [vmem:[#allocation3 + $0x10] sm:$0xff]
          %v1983 = vld [vmem:[#allocation3 + $0x18] sm:$0xff]
          %1985 = vset.pattern.permute.xlu0 0
          %1986 = vperm.xlu0 %1985, %v1976
          %v1987 = vpop.permute.xlu0 %1986
          %1990 = vset.pattern.permute.xlu0 0
          %1991 = vperm.xlu0 %1990, %v1977
          %v1992 = vpop.permute.xlu0 %1991
          %1995 = vset.pattern.permute.xlu0 0
          %1996 = vperm.xlu0 %1995, %v1978
          %v1997 = vpop.permute.xlu0 %1996
          %2000 = vset.pattern.permute.xlu0 0
          %2001 = vperm.xlu0 %2000, %v1979
          %v2002 = vpop.permute.xlu0 %2001
          %v2004 = vmul.f32 %v1980, %v1987
          %v2005 = vmul.f32 %v1981, %v1992
          %v2006 = vmul.f32 %v1982, %v1997
          %v2007 = vmul.f32 %v1983, %v2002
          %2008 = vst.msk [vmem:[#allocation3] sm:$0xff] %vm1592, %v2004
          %2009 = vst.msk [vmem:[#allocation3 + $0x8] sm:$0xff] %vm1592, %v2005
          %2010 = vst.msk [vmem:[#allocation3 + $0x10] sm:$0xff] %vm1592, %v2006
          %2011 = vst.msk [vmem:[#allocation3 + $0x18] sm:$0xff] %vm1592, %v2007
          %v2012 = vld [vmem:[%s1739] sm:$0xff]
          %v2013 = vld [vmem:[%s1739 + $0x8] sm:$0xff]
          %v2014 = vld [vmem:[%s1739 + $0x10] sm:$0xff]
          %v2015 = vld [vmem:[%s1739 + $0x18] sm:$0xff]
          %v2016 = vrcp.pop %v2012
          %v2017 = vrcp.pop %v2013
          %v2018 = vrcp.pop %v2014
          %v2019 = vrcp.pop %v2015
          %v2020 = vld [vmem:[#allocation3] sm:$0xff]
          %v2021 = vld [vmem:[#allocation3 + $0x8] sm:$0xff]
          %v2022 = vld [vmem:[#allocation3 + $0x10] sm:$0xff]
          %v2023 = vld [vmem:[#allocation3 + $0x18] sm:$0xff]
          %2025 = vset.pattern.permute.xlu0 0
          %2026 = vperm.xlu0 %2025, %v2016
          %v2027 = vpop.permute.xlu0 %2026
          %2030 = vset.pattern.permute.xlu0 0
          %2031 = vperm.xlu0 %2030, %v2017
          %v2032 = vpop.permute.xlu0 %2031
          %2035 = vset.pattern.permute.xlu0 0
          %2036 = vperm.xlu0 %2035, %v2018
          %v2037 = vpop.permute.xlu0 %2036
          %2040 = vset.pattern.permute.xlu0 0
          %2041 = vperm.xlu0 %2040, %v2019
          %v2042 = vpop.permute.xlu0 %2041
          %v2044 = vmul.f32 %v2020, %v2027
          %v2045 = vmul.f32 %v2021, %v2032
          %v2046 = vmul.f32 %v2022, %v2037
          %v2047 = vmul.f32 %v2023, %v2042
          %2048 = vst.msk [vmem:[#allocation3] sm:$0xff] %vm1879, %v2044
          %2049 = vst.msk [vmem:[#allocation3 + $0x8] sm:$0xff] %vm1879, %v2045
          %2050 = vst.msk [vmem:[#allocation3 + $0x10] sm:$0xff] %vm1879, %v2046
          %2051 = vst.msk [vmem:[#allocation3 + $0x18] sm:$0xff] %vm1879, %v2047
          %v2052 = vld [vmem:[#allocation3] sm:$0xff]
          %v2053 = vld [vmem:[#allocation3 + $0x8] sm:$0xff]
          %v2054 = vld [vmem:[#allocation3 + $0x10] sm:$0xff]
          %v2055 = vld [vmem:[#allocation3 + $0x18] sm:$0xff]
          %v2056 = vpack.c.bf16 %v2053, %v2052
          %v2057 = vpack.c.bf16 %v2055, %v2054
          %v2058 = vld [vmem:[#allocation12] sm:$0xf]
          %v2059 = vld [vmem:[#allocation12 + $0x4] sm:$0xf]
          %v2060 = vld [vmem:[#allocation12 + $0x8] sm:$0xf]
          %v2061 = vld [vmem:[#allocation12 + $0xc] sm:$0xf]
          %v2062 = vld [vmem:[#allocation12 + $0x10] sm:$0xf]
          %v2063 = vld [vmem:[#allocation12 + $0x14] sm:$0xf]
          %v2064 = vld [vmem:[#allocation12 + $0x18] sm:$0xf]
          %v2065 = vld [vmem:[#allocation12 + $0x1c] sm:$0xf]
          %v2066 = vld [vmem:[#allocation12 + $0x20] sm:$0xf]
          %v2067 = vld [vmem:[#allocation12 + $0x24] sm:$0xf]
          %v2068 = vld [vmem:[#allocation12 + $0x28] sm:$0xf]
          %v2069 = vld [vmem:[#allocation12 + $0x2c] sm:$0xf]
          %v2070 = vld [vmem:[#allocation12 + $0x30] sm:$0xf]
          %v2071 = vld [vmem:[#allocation12 + $0x34] sm:$0xf]
          %v2072 = vld [vmem:[#allocation12 + $0x38] sm:$0xf]
          %v2073 = vld [vmem:[#allocation12 + $0x3c] sm:$0xf]
          %v2074 = vld [vmem:[%s4] sm:$0x1]
          %v2076 = vlaneseq
          %v2077 = vshrl.u32 %v2076, 7
          %v2078 = vsub.s32 0, %v2077
          %v2079 = vrot.slane %v2074, %v2078
          %v2097 = vunpack.c.l.b16 %v2058
          %v2098 = vunpack.c.l.b16 %v2059
          %v2099 = vunpack.c.l.b16 %v2060
          %v2100 = vunpack.c.l.b16 %v2061
          %v2101 = vunpack.c.l.b16 %v2062
          %v2102 = vunpack.c.l.b16 %v2063
          %v2103 = vunpack.c.l.b16 %v2064
          %v2104 = vunpack.c.l.b16 %v2065
          %v2105 = vunpack.c.l.b16 %v2066
          %v2106 = vunpack.c.l.b16 %v2067
          %v2107 = vunpack.c.l.b16 %v2068
          %v2108 = vunpack.c.l.b16 %v2069
          %v2109 = vunpack.c.l.b16 %v2070
          %v2110 = vunpack.c.l.b16 %v2071
          %v2111 = vunpack.c.l.b16 %v2072
          %v2112 = vunpack.c.l.b16 %v2073
          %v2113 = vpack.c.b16 %v2098, %v2097
          %v2114 = vpack.c.b16 %v2100, %v2099
          %v2115 = vpack.c.b16 %v2102, %v2101
          %v2116 = vpack.c.b16 %v2104, %v2103
          %v2117 = vpack.c.b16 %v2106, %v2105
          %v2118 = vpack.c.b16 %v2108, %v2107
          %v2119 = vpack.c.b16 %v2110, %v2109
          %v2120 = vpack.c.b16 %v2112, %v2111
          %2129 = vmatprep.subr.bf16.mxu0 0
          %2130 = vmatpush1.bf16.msra.mxu0 %v2113
          %2131 = vmatprep.subr.bf16.mxu0 0
          %2132 = vmatpush1.bf16.msra.mxu0 %v2114
          %2133 = vmatprep.subr.bf16.mxu0 0
          %2134 = vmatpush1.bf16.msra.mxu0 %v2115
          %2135 = vmatprep.subr.bf16.mxu0 0
          %2136 = vmatpush1.bf16.msra.mxu0 %v2116
          %2137 = vmatprep.subr.bf16.mxu0 0
          %2138 = vmatpush1.bf16.msra.mxu0 %v2117
          %2139 = vmatprep.subr.bf16.mxu0 0
          %2140 = vmatpush1.bf16.msra.mxu0 %v2118
          %2141 = vmatprep.subr.bf16.mxu0 0
          %2142 = vmatpush1.bf16.msra.mxu0 %v2119
          %2143 = vmatprep.subr.bf16.mxu0 0
          %2144 = vmatpush1.bf16.msra.mxu0 %v2120
          %2145 = vmatprep.subr.bf16.mxu0 0
          %2146 = vmatpush1.bf16.msra.mxu0 0
          %2147 = vmatprep.subr.bf16.mxu0 0
          %2148 = vmatpush1.bf16.msra.mxu0 0
          %2149 = vmatprep.subr.bf16.mxu0 0
          %2150 = vmatpush1.bf16.msra.mxu0 0
          %2151 = vmatprep.subr.bf16.mxu0 0
          %2152 = vmatpush1.bf16.msra.mxu0 0
          %2153 = vmatprep.subr.bf16.mxu0 0
          %2154 = vmatpush1.bf16.msra.mxu0 0
          %2155 = vmatprep.subr.bf16.mxu0 0
          %2156 = vmatpush1.bf16.msra.mxu0 0
          %2157 = vmatprep.subr.bf16.mxu0 0
          %2158 = vmatpush1.bf16.msra.mxu0 0
          %2159 = vmatprep.subr.bf16.mxu0 0
          %2160 = vmatpush1.bf16.msra.mxu0 0
          %2161 = vmatprep.mubr.bf16.mxu0 0
          %2162 = vmatmul.mubr.bf16.gmra.mrb[0].mxu0 %v2056
          %v2163 = vpop.f32.mrb[0].mxu0
          %v2164 = vadd.f32 %v2079, %v2163
          %v2165 = vpop.f32.mrb[0].mxu0
          %v2166 = vpop.f32.mrb[0].mxu0
          %v2167 = vadd.f32 %v2079, %v2166
          %v2168 = vpop.f32.mrb[0].mxu0
          %2169 = vmatprep.mubr.bf16.mxu0 0
          %2170 = vmatmul.mubr.bf16.gmra.mrb[0].mxu0 %v2057
          %v2171 = vpop.f32.mrb[0].mxu0
          %v2172 = vadd.f32 %v2079, %v2171
          %v2173 = vpop.f32.mrb[0].mxu0
          %v2174 = vpop.f32.mrb[0].mxu0
          %v2175 = vadd.f32 %v2079, %v2174
          %v2176 = vpop.f32.mrb[0].mxu0
          %2177 = vdwg.mxu0
          %2178 = vst [vmem:[%s340] sm:$0xff] %v2164
          %2179 = vst [vmem:[%s340 + $0x8] sm:$0xff] %v2167
          %2180 = vst [vmem:[%s340 + $0x10] sm:$0xff] %v2172
          %2181 = vst [vmem:[%s340 + $0x18] sm:$0xff] %v2175
        $region64: #{tpu_custom_call.1} parent=39 // pred_fallthru
          _
        %s2182 = sand.u32 %s174, 1
        %s2183 = scalar_lea.sflag [#allocation8], %s2182
        %s2184 = sand.u32 %s174, 1
        %s2185 = smul.addr %s2184, 32
        %s2186 = scalar_lea.vmem [#allocation14], %s2185
        // Predicated region
        $region65: #{tpu_custom_call.1} parent=39 // pred_check
          %p2187 = pneg %p184
        $region66: #{tpu_custom_call.1} parent=39 // pred_check_branch
          %2189 = sbr.rel (%p2187) target = $region68
        $region67: #{tpu_custom_call.1} parent=39 // pred_region
          %s2190 = smul.u32 4, %s32
          %s2192 = ssub.s32 512, 512
          %2193 = vsyncadd %s2183, %s2192
          %s2194 = smul.addr %s31, 8
          %s2195 = sadd.s32 %s2190, %s2194
          %s2196 = smul.addr %s2195, 128
          %s2197 = scalar_lea.hbm %s5, %s2196
          %s2198 = sshll.u32 %s2186, 4
          %s2199 = int_to_ptr.vmem [resolvable:$true] %s2198
          %2204 = dma.vmem_to_hbm [thread:$0]  %s2199, 512, %s2197, %s2183, 128, 128, 8
        $region68: #{tpu_custom_call.1} parent=39 // pred_fallthru
          _
      $region40: #{tpu_custom_call.1} parent=5 // pred_fallthru
        _
      %p2205 = scmp.le.s32.totalorder 2, %s21
      // Predicated region
      $region69: #{tpu_custom_call.1} parent=5 // pred_check
        %p2206 = pneg %p2205
      $region70: #{tpu_custom_call.1} parent=5 // pred_check_branch
        %2208 = sbr.rel (%p2206) target = $region72
      $region71: #{tpu_custom_call.1} parent=5 // pred_region
        %s2209 = ssub.s32 %s21, 2
        // Predicated region
        $region73: #{tpu_custom_call.1} parent=71 // pred_check
          %p2210 = pneg %p190
        $region74: #{tpu_custom_call.1} parent=71 // pred_check_branch
          %2212 = sbr.rel (%p2210) target = $region76
        $region75: #{tpu_custom_call.1} parent=71 // pred_region
          %s2213 = sand.u32 %s175, 1
          %s2214 = scalar_lea.sflag [#allocation8], %s2213
          %s2215 = sand.u32 %s175, 1
          %s2216 = smul.addr %s2215, 32
          %s2217 = scalar_lea.vmem [#allocation14], %s2216
          %2218 = dma.done %s2214, 512
        $region76: #{tpu_custom_call.1} parent=71 // pred_fallthru
          _
      $region72: #{tpu_custom_call.1} parent=5 // pred_fallthru
        _
    $region6: #{tpu_custom_call.1} parent=1 // loop_footer
      %s25 = sadd.s32 1, %s21
    $region7: #{tpu_custom_call.1} parent=1 // loop_footer_branch
      %20 = sbr.rel target = $region3
    $region8: #{tpu_custom_call.1} parent=1 // loop_exit
      _
    %2219 = vsyncpa [#allocation7], 1
    %s2220 = scalar_lea.sflag [#allocation7], 1
    %2221 = vsyncpa %s2220, 1
    %2222 = vsyncpa [#allocation10], 1
    %s2223 = scalar_lea.sflag [#allocation10], 1
    %2224 = vsyncpa %s2223, 1
    %2225 = vsyncpa [#allocation13], 1
    %2226 = vsyncpa [#allocation8], 1
    %s2227 = scalar_lea.sflag [#allocation8], 1
    %2228 = vsyncpa %s2227, 1

</llo_original>
